<compile_context>
chip_gen: v7x
topology: tpu7x:2x2x1
jax: 0.10.0
libtpu: 0.0.40
codegen_flags: <defaults>
</compile_context>

<pallas_src>
import math
import jax
import jax.numpy as jnp
from jax.experimental import pallas as pl
from jax.experimental.pallas import tpu as pltpu


# ----------------------------- Pallas kernel --------------------------------
def gin_net2_kernel(nid_ref, eps_ref,                       # SMEM
                    x_ref, adj_ref,
                    w1_ref, b1_ref, w2_ref, b2_ref, w3_ref, b3_ref, bn1b_ref,
                    w4_ref, b4_ref, bn2b_ref,
                    wl1_ref, bl1_ref, wl2_ref, bl2_ref,
                    wf2_ref, bf2_ref,
                    out_ref,
                    h3_scratch, fused_scratch):
    f32 = jnp.float32
    x = x_ref[...]
    adj = adj_ref[...].astype(f32)          # bf16 integer counts -> exact f32
    eps1 = eps_ref[0]
    eps2 = eps_ref[1]

    # ---- GINConv 1: MLP((1+eps1)*x + sum_neighbors x)
    h = jnp.dot(adj, x, preferred_element_type=f32) + (1.0 + eps1) * x
    h = jnp.maximum(jnp.dot(h, w1_ref[...], preferred_element_type=f32) + b1_ref[...], 0.0)
    h = jnp.maximum(jnp.dot(h, w2_ref[...], preferred_element_type=f32) + b2_ref[...], 0.0)
    # BN1 (eval) scale is pre-folded into w3/b3; shift added post-ReLU.
    h = jnp.maximum(jnp.dot(h, w3_ref[...], preferred_element_type=f32) + b3_ref[...], 0.0)
    h = h + bn1b_ref[...]

    # ---- GINConv 2: MLP((1+eps2)*h + sum_neighbors h)
    h2 = jnp.dot(adj, h, preferred_element_type=f32) + (1.0 + eps2) * h
    h2 = jnp.maximum(jnp.dot(h2, w4_ref[...], preferred_element_type=f32) + b4_ref[...], 0.0)
    h2 = h2 + bn2b_ref[...]

    # ---- head: relu(lin1) -> dropout(eval) -> lin2
    h3 = jnp.maximum(jnp.dot(h2, wl1_ref[...], preferred_element_type=f32) + bl1_ref[...], 0.0)
    # TODO(synk): F.dropout with training=True (RNG mask) not implemented; eval-mode identity.
    h3 = jnp.dot(h3, wl2_ref[...], preferred_element_type=f32) + bl2_ref[...]
    h3_scratch[...] = h3

    # ---- edge-pair fusion: fused[t] = h3[node_id[0,t]] * h3[node_id[1,t]]
    # node_id scalars live in SMEM; rows are gathered with dynamic sublane slices.
    T = fused_scratch.shape[0]
    for t in range(T):                       # T is small & static -> unrolled
        i0 = nid_ref[0, t]
        i1 = nid_ref[1, t]
        r0 = h3_scratch[pl.ds(i0, 1), :]
        r1 = h3_scratch[pl.ds(i1, 1), :]
        fused_scratch[pl.ds(t, 1), :] = r0 * r1

    # ---- fc2 (lane-padded output, sliced back in the wrapper)
    out_ref[...] = (jnp.dot(fused_scratch[...], wf2_ref[...], preferred_element_type=f32)
                    + bf2_ref[...])


# ------------------------------ Wrapper --------------------------------------
def _round_up(v, m):
    return ((v + m - 1) // m) * m


def precompute_graph(edge_index, train_edge_id, num_nodes):
    """Graph-static tensors. Cache these when the graph does not change per call."""
    src, dst = edge_index[0], edge_index[1]
    # agg[i] = sum over edges (src->dst==i) of x[src]; entries are small integers,
    # exact in bf16 (halves the dominant VMEM/DMA footprint).
    adj = jnp.zeros((num_nodes, num_nodes), jnp.float32).at[dst, src].add(1.0)
    node_id = edge_index[:, train_edge_id].astype(jnp.int32)          # (2, T)
    return adj.astype(jnp.bfloat16), node_id


def gin_net2_forward(x, adj_bf16, node_id, params):
    """x: [N, gin_in_feature] f32, adj_bf16: [N, N] bf16, node_id: [2, T] int32."""
    N, F_in = x.shape
    H = params["w1"].shape[1]
    C = params["wf2"].shape[1]
    T = node_id.shape[1]

    LANE = 128
    F_pad = _round_up(F_in, LANE)
    C_pad = _round_up(C, LANE)

    # eps scalars -> SMEM
    eps = jnp.stack([params["eps1"], params["eps2"]]).astype(jnp.float32)   # (2,)

    # lane padding with zeros (exact)
    x_p = jnp.pad(x, ((0, 0), (0, F_pad - F_in)))
    w1_p = jnp.pad(params["w1"], ((0, F_pad - F_in), (0, 0)))
    wf2_p = jnp.pad(params["wf2"], ((0, 0), (0, C_pad - C)))
    bf2_p = jnp.pad(params["bf2"], ((0, 0), (0, C_pad - C)))

    # Fold eval-mode BN scale into the preceding Linear (valid because scale > 0:
    # relu(z)*s == relu(z*s)); the BN shift stays as a post-ReLU additive bias.
    w3_f = params["w3"] * params["bn1_s"]
    b3_f = params["b3"] * params["bn1_s"]
    w4_f = params["w4"] * params["bn2_s"]
    b4_f = params["b4"] * params["bn2_s"]

    args = (node_id, eps, x_p, adj_bf16,
            w1_p, params["b1"], params["w2"], params["b2"], w3_f, b3_f, params["bn1_b"],
            w4_f, b4_f, params["bn2_b"],
            params["wl1"], params["bl1"], params["wl2"], params["bl2"],
            wf2_p, bf2_p)

    smem = pl.BlockSpec(memory_space=pltpu.MemorySpace.SMEM)
    vmem = pl.BlockSpec(memory_space=pltpu.MemorySpace.VMEM)
    in_specs = [smem, smem] + [vmem] * (len(args) - 2)

    out = pl.pallas_call(
        gin_net2_kernel,
        out_shape=jax.ShapeDtypeStruct((T, C_pad), jnp.float32),
        in_specs=in_specs,
        out_specs=vmem,
        scratch_shapes=[pltpu.VMEM((N, H), jnp.float32),    # h3 (for row gathers)
                        pltpu.VMEM((T, H), jnp.float32)],   # fused edge pairs
    )(*args)
    return out[:, :C]


# --------------------------- Parameter init ----------------------------------
def _linear(key, fan_in, fan_out):
    kw, kb = jax.random.split(key)
    bound = 1.0 / math.sqrt(fan_in)
    w = jax.random.uniform(kw, (fan_in, fan_out), jnp.float32, -bound, bound)
    b = jax.random.uniform(kb, (1, fan_out), jnp.float32, -bound, bound)
    return w, b


def init_params(key, gin_in_feature, hidden, class_num):
    ks = jax.random.split(key, 8)
    p = {}
    # gin_conv1 MLP: Lin(F,H) ReLU Lin(H,H) ReLU Lin(H,H) ReLU BN(H)
    p["w1"], p["b1"] = _linear(ks[0], gin_in_feature, hidden)
    p["w2"], p["b2"] = _linear(ks[1], hidden, hidden)
    p["w3"], p["b3"] = _linear(ks[2], hidden, hidden)
    # gin_convs[0] MLP: Lin(H,H) ReLU BN(H)
    p["w4"], p["b4"] = _linear(ks[3], hidden, hidden)
    # BatchNorm1d eval-mode affine (default init: gamma=1, beta=0, mean=0, var=1)
    # scale = gamma/sqrt(var+eps) > 0, shift = beta - mean*scale
    bn_eps = 1e-5
    scale = jnp.full((1, hidden), 1.0 / math.sqrt(1.0 + bn_eps), jnp.float32)
    p["bn1_s"], p["bn1_b"] = scale, jnp.zeros((1, hidden), jnp.float32)
    p["bn2_s"], p["bn2_b"] = scale, jnp.zeros((1, hidden), jnp.float32)
    # head
    p["wl1"], p["bl1"] = _linear(ks[4], hidden, hidden)
    p["wl2"], p["bl2"] = _linear(ks[5], hidden, hidden)
    p["wf2"], p["bf2"] = _linear(ks[6], hidden, class_num)
    # GINConv train_eps=True -> eps initialized to 0
    p["eps1"] = jnp.float32(0.0)
    p["eps2"] = jnp.float32(0.0)
    return p


# ---------------------- Pure-JAX reference (for checking) --------------------
def reference_forward(x, edge_index, train_edge_id, params):
    src, dst = edge_index[0], edge_index[1]
    agg = jnp.zeros_like(x).at[dst].add(x[src])
    h = (1.0 + params["eps1"]) * x + agg
    h = jax.nn.relu(h @ params["w1"] + params["b1"])
    h = jax.nn.relu(h @ params["w2"] + params["b2"])
    h = jax.nn.relu(h @ params["w3"] + params["b3"])
    h = h * params["bn1_s"] + params["bn1_b"]
    agg2 = jnp.zeros_like(h).at[dst].add(h[src])
    h2 = (1.0 + params["eps2"]) * h + agg2
    h2 = jax.nn.relu(h2 @ params["w4"] + params["b4"])
    h2 = h2 * params["bn2_s"] + params["bn2_b"]
    h3 = jax.nn.relu(h2 @ params["wl1"] + params["bl1"])
    h3 = h3 @ params["wl2"] + params["bl2"]
    node_id = edge_index[:, train_edge_id]
    fused = h3[node_id[0]] * h3[node_id[1]]
    return fused @ params["wf2"] + params["bf2"]


# --------------------------------- Main ---------------------------------------
if __name__ == "__main__":
    key = jax.random.PRNGKey(0)
    k_x, k_e, k_t, k_p = jax.random.split(key, 4)

    # Small shapes consistent with the module's forward:
    N = 32              # graph nodes
    F_IN = 64           # gin_in_feature (module default)
    HIDDEN = 128        # hidden (small but lane-dense)
    CLASS_NUM = 7       # class_num (module default)
    E = 64              # edges
    T = 16              # training edges selected by train_edge_id

    x = jax.random.normal(k_x, (N, F_IN), jnp.float32)
    edge_index = jax.random.randint(k_e, (2, E), 0, N, dtype=jnp.int32)
    train_edge_id = jax.random.permutation(k_t, E)[:T].astype(jnp.int32)
    params = init_params(k_p, F_IN, HIDDEN, CLASS_NUM)

    # Graph-static tensors hoisted off the per-call path (cacheable).
    adj_bf16, node_id = precompute_graph(edge_index, train_edge_id, N)

    fwd = jax.jit(gin_net2_forward)
    out = fwd(x, adj_bf16, node_id, params)
    out = jax.block_until_ready(out)

    ref = reference_forward(x, edge_index, train_edge_id, params)
    assert out.shape == (T, CLASS_NUM)
    assert jnp.allclose(out, ref, atol=2e-3, rtol=2e-3), "mismatch vs JAX reference"

    print("KERNEL_OK")
</pallas_src>

<mosaic_0001>
module attributes {stable_mosaic.version = 11 : i64} {
  func.func @gin_net2_kernel(%arg0: memref<2x16xi32, #tpu.memory_space<smem>>, %arg1: memref<2xf32, #tpu.memory_space<smem>>, %arg2: memref<32x128xf32, #tpu.memory_space<vmem>>, %arg3: memref<32x32xbf16, #tpu.memory_space<vmem>>, %arg4: memref<128x128xf32, #tpu.memory_space<vmem>>, %arg5: memref<1x128xf32, #tpu.memory_space<vmem>>, %arg6: memref<128x128xf32, #tpu.memory_space<vmem>>, %arg7: memref<1x128xf32, #tpu.memory_space<vmem>>, %arg8: memref<128x128xf32, #tpu.memory_space<vmem>>, %arg9: memref<1x128xf32, #tpu.memory_space<vmem>>, %arg10: memref<1x128xf32, #tpu.memory_space<vmem>>, %arg11: memref<128x128xf32, #tpu.memory_space<vmem>>, %arg12: memref<1x128xf32, #tpu.memory_space<vmem>>, %arg13: memref<1x128xf32, #tpu.memory_space<vmem>>, %arg14: memref<128x128xf32, #tpu.memory_space<vmem>>, %arg15: memref<1x128xf32, #tpu.memory_space<vmem>>, %arg16: memref<128x128xf32, #tpu.memory_space<vmem>>, %arg17: memref<1x128xf32, #tpu.memory_space<vmem>>, %arg18: memref<128x128xf32, #tpu.memory_space<vmem>>, %arg19: memref<1x128xf32, #tpu.memory_space<vmem>>, %arg20: memref<16x128xf32, #tpu.memory_space<vmem>>, %arg21: memref<32x128xf32, #tpu.memory_space<vmem>>, %arg22: memref<16x128xf32, #tpu.memory_space<vmem>>) attributes {dimension_semantics = [], scalar_prefetch = 0 : i64, scratch_operands = 2 : i64, tpu.core_type = #tpu.core_type<tc>} {
    %c0 = arith.constant 0 : index
    %c0_0 = arith.constant 0 : index
    %0 = vector.load %arg2[%c0, %c0_0] : memref<32x128xf32, #tpu.memory_space<vmem>>, vector<32x128xf32>
    %c0_1 = arith.constant 0 : index
    %c0_2 = arith.constant 0 : index
    %1 = vector.load %arg3[%c0_1, %c0_2] : memref<32x32xbf16, #tpu.memory_space<vmem>>, vector<32x32xbf16>
    %2 = arith.extf %1 : vector<32x32xbf16> to vector<32x32xf32>
    %c0_3 = arith.constant 0 : index
    %3 = memref.load %arg1[%c0_3] : memref<2xf32, #tpu.memory_space<smem>>
    %c1 = arith.constant 1 : index
    %4 = memref.load %arg1[%c1] : memref<2xf32, #tpu.memory_space<smem>>
    %cst = arith.constant dense<0.000000e+00> : vector<32x128xf32>
    %5 = tpu.matmul %2, %0, %cst {dimension_numbers = #tpu.dot_dimension_numbers<[1], [0], [0], [1], [0, 0, 1, 1], [], []>} : vector<32x32xf32>, vector<32x128xf32>, vector<32x128xf32> -> vector<32x128xf32>
    %cst_4 = arith.constant 1.000000e+00 : f32
    %6 = arith.addf %cst_4, %3 : f32
    %7 = vector.broadcast %6 : f32 to vector<32x128xf32>
    %8 = arith.mulf %7, %0 : vector<32x128xf32>
    %9 = arith.addf %5, %8 : vector<32x128xf32>
    %c0_5 = arith.constant 0 : index
    %c0_6 = arith.constant 0 : index
    %10 = vector.load %arg4[%c0_5, %c0_6] : memref<128x128xf32, #tpu.memory_space<vmem>>, vector<128x128xf32>
    %cst_7 = arith.constant dense<0.000000e+00> : vector<32x128xf32>
    %11 = tpu.matmul %9, %10, %cst_7 {dimension_numbers = #tpu.dot_dimension_numbers<[1], [0], [0], [1], [0, 0, 1, 1], [], []>} : vector<32x128xf32>, vector<128x128xf32>, vector<32x128xf32> -> vector<32x128xf32>
    %c0_8 = arith.constant 0 : index
    %c0_9 = arith.constant 0 : index
    %12 = vector.load %arg5[%c0_8, %c0_9] : memref<1x128xf32, #tpu.memory_space<vmem>>, vector<1x128xf32>
    %13 = vector.broadcast %12 : vector<1x128xf32> to vector<32x128xf32>
    %14 = arith.addf %11, %13 : vector<32x128xf32>
    %cst_10 = arith.constant 0.000000e+00 : f32
    %15 = vector.broadcast %cst_10 : f32 to vector<32x128xf32>
    %16 = arith.maximumf %14, %15 : vector<32x128xf32>
    %c0_11 = arith.constant 0 : index
    %c0_12 = arith.constant 0 : index
    %17 = vector.load %arg6[%c0_11, %c0_12] : memref<128x128xf32, #tpu.memory_space<vmem>>, vector<128x128xf32>
    %cst_13 = arith.constant dense<0.000000e+00> : vector<32x128xf32>
    %18 = tpu.matmul %16, %17, %cst_13 {dimension_numbers = #tpu.dot_dimension_numbers<[1], [0], [0], [1], [0, 0, 1, 1], [], []>} : vector<32x128xf32>, vector<128x128xf32>, vector<32x128xf32> -> vector<32x128xf32>
    %c0_14 = arith.constant 0 : index
    %c0_15 = arith.constant 0 : index
    %19 = vector.load %arg7[%c0_14, %c0_15] : memref<1x128xf32, #tpu.memory_space<vmem>>, vector<1x128xf32>
    %20 = vector.broadcast %19 : vector<1x128xf32> to vector<32x128xf32>
    %21 = arith.addf %18, %20 : vector<32x128xf32>
    %cst_16 = arith.constant 0.000000e+00 : f32
    %22 = vector.broadcast %cst_16 : f32 to vector<32x128xf32>
    %23 = arith.maximumf %21, %22 : vector<32x128xf32>
    %c0_17 = arith.constant 0 : index
    %c0_18 = arith.constant 0 : index
    %24 = vector.load %arg8[%c0_17, %c0_18] : memref<128x128xf32, #tpu.memory_space<vmem>>, vector<128x128xf32>
    %cst_19 = arith.constant dense<0.000000e+00> : vector<32x128xf32>
    %25 = tpu.matmul %23, %24, %cst_19 {dimension_numbers = #tpu.dot_dimension_numbers<[1], [0], [0], [1], [0, 0, 1, 1], [], []>} : vector<32x128xf32>, vector<128x128xf32>, vector<32x128xf32> -> vector<32x128xf32>
    %c0_20 = arith.constant 0 : index
    %c0_21 = arith.constant 0 : index
    %26 = vector.load %arg9[%c0_20, %c0_21] : memref<1x128xf32, #tpu.memory_space<vmem>>, vector<1x128xf32>
    %27 = vector.broadcast %26 : vector<1x128xf32> to vector<32x128xf32>
    %28 = arith.addf %25, %27 : vector<32x128xf32>
    %cst_22 = arith.constant 0.000000e+00 : f32
    %29 = vector.broadcast %cst_22 : f32 to vector<32x128xf32>
    %30 = arith.maximumf %28, %29 : vector<32x128xf32>
    %c0_23 = arith.constant 0 : index
    %c0_24 = arith.constant 0 : index
    %31 = vector.load %arg10[%c0_23, %c0_24] : memref<1x128xf32, #tpu.memory_space<vmem>>, vector<1x128xf32>
    %32 = vector.broadcast %31 : vector<1x128xf32> to vector<32x128xf32>
    %33 = arith.addf %30, %32 : vector<32x128xf32>
    %cst_25 = arith.constant dense<0.000000e+00> : vector<32x128xf32>
    %34 = tpu.matmul %2, %33, %cst_25 {dimension_numbers = #tpu.dot_dimension_numbers<[1], [0], [0], [1], [0, 0, 1, 1], [], []>} : vector<32x32xf32>, vector<32x128xf32>, vector<32x128xf32> -> vector<32x128xf32>
    %cst_26 = arith.constant 1.000000e+00 : f32
    %35 = arith.addf %cst_26, %4 : f32
    %36 = vector.broadcast %35 : f32 to vector<32x128xf32>
    %37 = arith.mulf %36, %33 : vector<32x128xf32>
    %38 = arith.addf %34, %37 : vector<32x128xf32>
    %c0_27 = arith.constant 0 : index
    %c0_28 = arith.constant 0 : index
    %39 = vector.load %arg11[%c0_27, %c0_28] : memref<128x128xf32, #tpu.memory_space<vmem>>, vector<128x128xf32>
    %cst_29 = arith.constant dense<0.000000e+00> : vector<32x128xf32>
    %40 = tpu.matmul %38, %39, %cst_29 {dimension_numbers = #tpu.dot_dimension_numbers<[1], [0], [0], [1], [0, 0, 1, 1], [], []>} : vector<32x128xf32>, vector<128x128xf32>, vector<32x128xf32> -> vector<32x128xf32>
    %c0_30 = arith.constant 0 : index
    %c0_31 = arith.constant 0 : index
    %41 = vector.load %arg12[%c0_30, %c0_31] : memref<1x128xf32, #tpu.memory_space<vmem>>, vector<1x128xf32>
    %42 = vector.broadcast %41 : vector<1x128xf32> to vector<32x128xf32>
    %43 = arith.addf %40, %42 : vector<32x128xf32>
    %cst_32 = arith.constant 0.000000e+00 : f32
    %44 = vector.broadcast %cst_32 : f32 to vector<32x128xf32>
    %45 = arith.maximumf %43, %44 : vector<32x128xf32>
    %c0_33 = arith.constant 0 : index
    %c0_34 = arith.constant 0 : index
    %46 = vector.load %arg13[%c0_33, %c0_34] : memref<1x128xf32, #tpu.memory_space<vmem>>, vector<1x128xf32>
    %47 = vector.broadcast %46 : vector<1x128xf32> to vector<32x128xf32>
    %48 = arith.addf %45, %47 : vector<32x128xf32>
    %c0_35 = arith.constant 0 : index
    %c0_36 = arith.constant 0 : index
    %49 = vector.load %arg14[%c0_35, %c0_36] : memref<128x128xf32, #tpu.memory_space<vmem>>, vector<128x128xf32>
    %cst_37 = arith.constant dense<0.000000e+00> : vector<32x128xf32>
    %50 = tpu.matmul %48, %49, %cst_37 {dimension_numbers = #tpu.dot_dimension_numbers<[1], [0], [0], [1], [0, 0, 1, 1], [], []>} : vector<32x128xf32>, vector<128x128xf32>, vector<32x128xf32> -> vector<32x128xf32>
    %c0_38 = arith.constant 0 : index
    %c0_39 = arith.constant 0 : index
    %51 = vector.load %arg15[%c0_38, %c0_39] : memref<1x128xf32, #tpu.memory_space<vmem>>, vector<1x128xf32>
    %52 = vector.broadcast %51 : vector<1x128xf32> to vector<32x128xf32>
    %53 = arith.addf %50, %52 : vector<32x128xf32>
    %cst_40 = arith.constant 0.000000e+00 : f32
    %54 = vector.broadcast %cst_40 : f32 to vector<32x128xf32>
    %55 = arith.maximumf %53, %54 : vector<32x128xf32>
    %c0_41 = arith.constant 0 : index
    %c0_42 = arith.constant 0 : index
    %56 = vector.load %arg16[%c0_41, %c0_42] : memref<128x128xf32, #tpu.memory_space<vmem>>, vector<128x128xf32>
    %cst_43 = arith.constant dense<0.000000e+00> : vector<32x128xf32>
    %57 = tpu.matmul %55, %56, %cst_43 {dimension_numbers = #tpu.dot_dimension_numbers<[1], [0], [0], [1], [0, 0, 1, 1], [], []>} : vector<32x128xf32>, vector<128x128xf32>, vector<32x128xf32> -> vector<32x128xf32>
    %c0_44 = arith.constant 0 : index
    %c0_45 = arith.constant 0 : index
    %58 = vector.load %arg17[%c0_44, %c0_45] : memref<1x128xf32, #tpu.memory_space<vmem>>, vector<1x128xf32>
    %59 = vector.broadcast %58 : vector<1x128xf32> to vector<32x128xf32>
    %60 = arith.addf %57, %59 : vector<32x128xf32>
    %c0_46 = arith.constant 0 : index
    %c0_47 = arith.constant 0 : index
    %61 = vector.load %arg21[%c0_46, %c0_47] : memref<32x128xf32, #tpu.memory_space<vmem>>, vector<32x128xf32>
    tpu.vector_store %arg21[%c0_46, %c0_47], %60 {strides = array<i32>} : memref<32x128xf32, #tpu.memory_space<vmem>>, vector<32x128xf32>,
    %c0_48 = arith.constant 0 : index
    %c0_49 = arith.constant 0 : index
    %62 = memref.load %arg0[%c0_48, %c0_49] : memref<2x16xi32, #tpu.memory_space<smem>>
    %c1_50 = arith.constant 1 : index
    %c0_51 = arith.constant 0 : index
    %63 = memref.load %arg0[%c1_50, %c0_51] : memref<2x16xi32, #tpu.memory_space<smem>>
    %64 = arith.index_cast %62 : i32 to index
    %c0_52 = arith.constant 0 : index
    %65 = vector.load %arg21[%64, %c0_52] : memref<32x128xf32, #tpu.memory_space<vmem>>, vector<1x128xf32>
    %66 = arith.index_cast %63 : i32 to index
    %c0_53 = arith.constant 0 : index
    %67 = vector.load %arg21[%66, %c0_53] : memref<32x128xf32, #tpu.memory_space<vmem>>, vector<1x128xf32>
    %68 = arith.mulf %65, %67 : vector<1x128xf32>
    %c0_54 = arith.constant 0 : index
    %c0_55 = arith.constant 0 : index
    %69 = vector.load %arg22[%c0_54, %c0_55] : memref<16x128xf32, #tpu.memory_space<vmem>>, vector<1x128xf32>
    tpu.vector_store %arg22[%c0_54, %c0_55], %68 {strides = array<i32>} : memref<16x128xf32, #tpu.memory_space<vmem>>, vector<1x128xf32>,
    %c0_56 = arith.constant 0 : index
    %c1_57 = arith.constant 1 : index
    %70 = memref.load %arg0[%c0_56, %c1_57] : memref<2x16xi32, #tpu.memory_space<smem>>
    %c1_58 = arith.constant 1 : index
    %c1_59 = arith.constant 1 : index
    %71 = memref.load %arg0[%c1_58, %c1_59] : memref<2x16xi32, #tpu.memory_space<smem>>
    %72 = arith.index_cast %70 : i32 to index
    %c0_60 = arith.constant 0 : index
    %73 = vector.load %arg21[%72, %c0_60] : memref<32x128xf32, #tpu.memory_space<vmem>>, vector<1x128xf32>
    %74 = arith.index_cast %71 : i32 to index
    %c0_61 = arith.constant 0 : index
    %75 = vector.load %arg21[%74, %c0_61] : memref<32x128xf32, #tpu.memory_space<vmem>>, vector<1x128xf32>
    %76 = arith.mulf %73, %75 : vector<1x128xf32>
    %c1_62 = arith.constant 1 : index
    %c0_63 = arith.constant 0 : index
    %77 = vector.load %arg22[%c1_62, %c0_63] : memref<16x128xf32, #tpu.memory_space<vmem>>, vector<1x128xf32>
    tpu.vector_store %arg22[%c1_62, %c0_63], %76 {strides = array<i32>} : memref<16x128xf32, #tpu.memory_space<vmem>>, vector<1x128xf32>,
    %c0_64 = arith.constant 0 : index
    %c2 = arith.constant 2 : index
    %78 = memref.load %arg0[%c0_64, %c2] : memref<2x16xi32, #tpu.memory_space<smem>>
    %c1_65 = arith.constant 1 : index
    %c2_66 = arith.constant 2 : index
    %79 = memref.load %arg0[%c1_65, %c2_66] : memref<2x16xi32, #tpu.memory_space<smem>>
    %80 = arith.index_cast %78 : i32 to index
    %c0_67 = arith.constant 0 : index
    %81 = vector.load %arg21[%80, %c0_67] : memref<32x128xf32, #tpu.memory_space<vmem>>, vector<1x128xf32>
    %82 = arith.index_cast %79 : i32 to index
    %c0_68 = arith.constant 0 : index
    %83 = vector.load %arg21[%82, %c0_68] : memref<32x128xf32, #tpu.memory_space<vmem>>, vector<1x128xf32>
    %84 = arith.mulf %81, %83 : vector<1x128xf32>
    %c2_69 = arith.constant 2 : index
    %c0_70 = arith.constant 0 : index
    %85 = vector.load %arg22[%c2_69, %c0_70] : memref<16x128xf32, #tpu.memory_space<vmem>>, vector<1x128xf32>
    tpu.vector_store %arg22[%c2_69, %c0_70], %84 {strides = array<i32>} : memref<16x128xf32, #tpu.memory_space<vmem>>, vector<1x128xf32>,
    %c0_71 = arith.constant 0 : index
    %c3 = arith.constant 3 : index
    %86 = memref.load %arg0[%c0_71, %c3] : memref<2x16xi32, #tpu.memory_space<smem>>
    %c1_72 = arith.constant 1 : index
    %c3_73 = arith.constant 3 : index
    %87 = memref.load %arg0[%c1_72, %c3_73] : memref<2x16xi32, #tpu.memory_space<smem>>
    %88 = arith.index_cast %86 : i32 to index
    %c0_74 = arith.constant 0 : index
    %89 = vector.load %arg21[%88, %c0_74] : memref<32x128xf32, #tpu.memory_space<vmem>>, vector<1x128xf32>
    %90 = arith.index_cast %87 : i32 to index
    %c0_75 = arith.constant 0 : index
    %91 = vector.load %arg21[%90, %c0_75] : memref<32x128xf32, #tpu.memory_space<vmem>>, vector<1x128xf32>
    %92 = arith.mulf %89, %91 : vector<1x128xf32>
    %c3_76 = arith.constant 3 : index
    %c0_77 = arith.constant 0 : index
    %93 = vector.load %arg22[%c3_76, %c0_77] : memref<16x128xf32, #tpu.memory_space<vmem>>, vector<1x128xf32>
    tpu.vector_store %arg22[%c3_76, %c0_77], %92 {strides = array<i32>} : memref<16x128xf32, #tpu.memory_space<vmem>>, vector<1x128xf32>,
    %c0_78 = arith.constant 0 : index
    %c4 = arith.constant 4 : index
    %94 = memref.load %arg0[%c0_78, %c4] : memref<2x16xi32, #tpu.memory_space<smem>>
    %c1_79 = arith.constant 1 : index
    %c4_80 = arith.constant 4 : index
    %95 = memref.load %arg0[%c1_79, %c4_80] : memref<2x16xi32, #tpu.memory_space<smem>>
    %96 = arith.index_cast %94 : i32 to index
    %c0_81 = arith.constant 0 : index
    %97 = vector.load %arg21[%96, %c0_81] : memref<32x128xf32, #tpu.memory_space<vmem>>, vector<1x128xf32>
    %98 = arith.index_cast %95 : i32 to index
    %c0_82 = arith.constant 0 : index
    %99 = vector.load %arg21[%98, %c0_82] : memref<32x128xf32, #tpu.memory_space<vmem>>, vector<1x128xf32>
    %100 = arith.mulf %97, %99 : vector<1x128xf32>
    %c4_83 = arith.constant 4 : index
    %c0_84 = arith.constant 0 : index
    %101 = vector.load %arg22[%c4_83, %c0_84] : memref<16x128xf32, #tpu.memory_space<vmem>>, vector<1x128xf32>
    tpu.vector_store %arg22[%c4_83, %c0_84], %100 {strides = array<i32>} : memref<16x128xf32, #tpu.memory_space<vmem>>, vector<1x128xf32>,
    %c0_85 = arith.constant 0 : index
    %c5 = arith.constant 5 : index
    %102 = memref.load %arg0[%c0_85, %c5] : memref<2x16xi32, #tpu.memory_space<smem>>
    %c1_86 = arith.constant 1 : index
    %c5_87 = arith.constant 5 : index
    %103 = memref.load %arg0[%c1_86, %c5_87] : memref<2x16xi32, #tpu.memory_space<smem>>
    %104 = arith.index_cast %102 : i32 to index
    %c0_88 = arith.constant 0 : index
    %105 = vector.load %arg21[%104, %c0_88] : memref<32x128xf32, #tpu.memory_space<vmem>>, vector<1x128xf32>
    %106 = arith.index_cast %103 : i32 to index
    %c0_89 = arith.constant 0 : index
    %107 = vector.load %arg21[%106, %c0_89] : memref<32x128xf32, #tpu.memory_space<vmem>>, vector<1x128xf32>
    %108 = arith.mulf %105, %107 : vector<1x128xf32>
    %c5_90 = arith.constant 5 : index
    %c0_91 = arith.constant 0 : index
    %109 = vector.load %arg22[%c5_90, %c0_91] : memref<16x128xf32, #tpu.memory_space<vmem>>, vector<1x128xf32>
    tpu.vector_store %arg22[%c5_90, %c0_91], %108 {strides = array<i32>} : memref<16x128xf32, #tpu.memory_space<vmem>>, vector<1x128xf32>,
    %c0_92 = arith.constant 0 : index
    %c6 = arith.constant 6 : index
    %110 = memref.load %arg0[%c0_92, %c6] : memref<2x16xi32, #tpu.memory_space<smem>>
    %c1_93 = arith.constant 1 : index
    %c6_94 = arith.constant 6 : index
    %111 = memref.load %arg0[%c1_93, %c6_94] : memref<2x16xi32, #tpu.memory_space<smem>>
    %112 = arith.index_cast %110 : i32 to index
    %c0_95 = arith.constant 0 : index
    %113 = vector.load %arg21[%112, %c0_95] : memref<32x128xf32, #tpu.memory_space<vmem>>, vector<1x128xf32>
    %114 = arith.index_cast %111 : i32 to index
    %c0_96 = arith.constant 0 : index
    %115 = vector.load %arg21[%114, %c0_96] : memref<32x128xf32, #tpu.memory_space<vmem>>, vector<1x128xf32>
    %116 = arith.mulf %113, %115 : vector<1x128xf32>
    %c6_97 = arith.constant 6 : index
    %c0_98 = arith.constant 0 : index
    %117 = vector.load %arg22[%c6_97, %c0_98] : memref<16x128xf32, #tpu.memory_space<vmem>>, vector<1x128xf32>
    tpu.vector_store %arg22[%c6_97, %c0_98], %116 {strides = array<i32>} : memref<16x128xf32, #tpu.memory_space<vmem>>, vector<1x128xf32>,
    %c0_99 = arith.constant 0 : index
    %c7 = arith.constant 7 : index
    %118 = memref.load %arg0[%c0_99, %c7] : memref<2x16xi32, #tpu.memory_space<smem>>
    %c1_100 = arith.constant 1 : index
    %c7_101 = arith.constant 7 : index
    %119 = memref.load %arg0[%c1_100, %c7_101] : memref<2x16xi32, #tpu.memory_space<smem>>
    %120 = arith.index_cast %118 : i32 to index
    %c0_102 = arith.constant 0 : index
    %121 = vector.load %arg21[%120, %c0_102] : memref<32x128xf32, #tpu.memory_space<vmem>>, vector<1x128xf32>
    %122 = arith.index_cast %119 : i32 to index
    %c0_103 = arith.constant 0 : index
    %123 = vector.load %arg21[%122, %c0_103] : memref<32x128xf32, #tpu.memory_space<vmem>>, vector<1x128xf32>
    %124 = arith.mulf %121, %123 : vector<1x128xf32>
    %c7_104 = arith.constant 7 : index
    %c0_105 = arith.constant 0 : index
    %125 = vector.load %arg22[%c7_104, %c0_105] : memref<16x128xf32, #tpu.memory_space<vmem>>, vector<1x128xf32>
    tpu.vector_store %arg22[%c7_104, %c0_105], %124 {strides = array<i32>} : memref<16x128xf32, #tpu.memory_space<vmem>>, vector<1x128xf32>,
    %c0_106 = arith.constant 0 : index
    %c8 = arith.constant 8 : index
    %126 = memref.load %arg0[%c0_106, %c8] : memref<2x16xi32, #tpu.memory_space<smem>>
    %c1_107 = arith.constant 1 : index
    %c8_108 = arith.constant 8 : index
    %127 = memref.load %arg0[%c1_107, %c8_108] : memref<2x16xi32, #tpu.memory_space<smem>>
    %128 = arith.index_cast %126 : i32 to index
    %c0_109 = arith.constant 0 : index
    %129 = vector.load %arg21[%128, %c0_109] : memref<32x128xf32, #tpu.memory_space<vmem>>, vector<1x128xf32>
    %130 = arith.index_cast %127 : i32 to index
    %c0_110 = arith.constant 0 : index
    %131 = vector.load %arg21[%130, %c0_110] : memref<32x128xf32, #tpu.memory_space<vmem>>, vector<1x128xf32>
    %132 = arith.mulf %129, %131 : vector<1x128xf32>
    %c8_111 = arith.constant 8 : index
    %c0_112 = arith.constant 0 : index
    %133 = vector.load %arg22[%c8_111, %c0_112] : memref<16x128xf32, #tpu.memory_space<vmem>>, vector<1x128xf32>
    tpu.vector_store %arg22[%c8_111, %c0_112], %132 {strides = array<i32>} : memref<16x128xf32, #tpu.memory_space<vmem>>, vector<1x128xf32>,
    %c0_113 = arith.constant 0 : index
    %c9 = arith.constant 9 : index
    %134 = memref.load %arg0[%c0_113, %c9] : memref<2x16xi32, #tpu.memory_space<smem>>
    %c1_114 = arith.constant 1 : index
    %c9_115 = arith.constant 9 : index
    %135 = memref.load %arg0[%c1_114, %c9_115] : memref<2x16xi32, #tpu.memory_space<smem>>
    %136 = arith.index_cast %134 : i32 to index
    %c0_116 = arith.constant 0 : index
    %137 = vector.load %arg21[%136, %c0_116] : memref<32x128xf32, #tpu.memory_space<vmem>>, vector<1x128xf32>
    %138 = arith.index_cast %135 : i32 to index
    %c0_117 = arith.constant 0 : index
    %139 = vector.load %arg21[%138, %c0_117] : memref<32x128xf32, #tpu.memory_space<vmem>>, vector<1x128xf32>
    %140 = arith.mulf %137, %139 : vector<1x128xf32>
    %c9_118 = arith.constant 9 : index
    %c0_119 = arith.constant 0 : index
    %141 = vector.load %arg22[%c9_118, %c0_119] : memref<16x128xf32, #tpu.memory_space<vmem>>, vector<1x128xf32>
    tpu.vector_store %arg22[%c9_118, %c0_119], %140 {strides = array<i32>} : memref<16x128xf32, #tpu.memory_space<vmem>>, vector<1x128xf32>,
    %c0_120 = arith.constant 0 : index
    %c10 = arith.constant 10 : index
    %142 = memref.load %arg0[%c0_120, %c10] : memref<2x16xi32, #tpu.memory_space<smem>>
    %c1_121 = arith.constant 1 : index
    %c10_122 = arith.constant 10 : index
    %143 = memref.load %arg0[%c1_121, %c10_122] : memref<2x16xi32, #tpu.memory_space<smem>>
    %144 = arith.index_cast %142 : i32 to index
    %c0_123 = arith.constant 0 : index
    %145 = vector.load %arg21[%144, %c0_123] : memref<32x128xf32, #tpu.memory_space<vmem>>, vector<1x128xf32>
    %146 = arith.index_cast %143 : i32 to index
    %c0_124 = arith.constant 0 : index
    %147 = vector.load %arg21[%146, %c0_124] : memref<32x128xf32, #tpu.memory_space<vmem>>, vector<1x128xf32>
    %148 = arith.mulf %145, %147 : vector<1x128xf32>
    %c10_125 = arith.constant 10 : index
    %c0_126 = arith.constant 0 : index
    %149 = vector.load %arg22[%c10_125, %c0_126] : memref<16x128xf32, #tpu.memory_space<vmem>>, vector<1x128xf32>
    tpu.vector_store %arg22[%c10_125, %c0_126], %148 {strides = array<i32>} : memref<16x128xf32, #tpu.memory_space<vmem>>, vector<1x128xf32>,
    %c0_127 = arith.constant 0 : index
    %c11 = arith.constant 11 : index
    %150 = memref.load %arg0[%c0_127, %c11] : memref<2x16xi32, #tpu.memory_space<smem>>
    %c1_128 = arith.constant 1 : index
    %c11_129 = arith.constant 11 : index
    %151 = memref.load %arg0[%c1_128, %c11_129] : memref<2x16xi32, #tpu.memory_space<smem>>
    %152 = arith.index_cast %150 : i32 to index
    %c0_130 = arith.constant 0 : index
    %153 = vector.load %arg21[%152, %c0_130] : memref<32x128xf32, #tpu.memory_space<vmem>>, vector<1x128xf32>
    %154 = arith.index_cast %151 : i32 to index
    %c0_131 = arith.constant 0 : index
    %155 = vector.load %arg21[%154, %c0_131] : memref<32x128xf32, #tpu.memory_space<vmem>>, vector<1x128xf32>
    %156 = arith.mulf %153, %155 : vector<1x128xf32>
    %c11_132 = arith.constant 11 : index
    %c0_133 = arith.constant 0 : index
    %157 = vector.load %arg22[%c11_132, %c0_133] : memref<16x128xf32, #tpu.memory_space<vmem>>, vector<1x128xf32>
    tpu.vector_store %arg22[%c11_132, %c0_133], %156 {strides = array<i32>} : memref<16x128xf32, #tpu.memory_space<vmem>>, vector<1x128xf32>,
    %c0_134 = arith.constant 0 : index
    %c12 = arith.constant 12 : index
    %158 = memref.load %arg0[%c0_134, %c12] : memref<2x16xi32, #tpu.memory_space<smem>>
    %c1_135 = arith.constant 1 : index
    %c12_136 = arith.constant 12 : index
    %159 = memref.load %arg0[%c1_135, %c12_136] : memref<2x16xi32, #tpu.memory_space<smem>>
    %160 = arith.index_cast %158 : i32 to index
    %c0_137 = arith.constant 0 : index
    %161 = vector.load %arg21[%160, %c0_137] : memref<32x128xf32, #tpu.memory_space<vmem>>, vector<1x128xf32>
    %162 = arith.index_cast %159 : i32 to index
    %c0_138 = arith.constant 0 : index
    %163 = vector.load %arg21[%162, %c0_138] : memref<32x128xf32, #tpu.memory_space<vmem>>, vector<1x128xf32>
    %164 = arith.mulf %161, %163 : vector<1x128xf32>
    %c12_139 = arith.constant 12 : index
    %c0_140 = arith.constant 0 : index
    %165 = vector.load %arg22[%c12_139, %c0_140] : memref<16x128xf32, #tpu.memory_space<vmem>>, vector<1x128xf32>
    tpu.vector_store %arg22[%c12_139, %c0_140], %164 {strides = array<i32>} : memref<16x128xf32, #tpu.memory_space<vmem>>, vector<1x128xf32>,
    %c0_141 = arith.constant 0 : index
    %c13 = arith.constant 13 : index
    %166 = memref.load %arg0[%c0_141, %c13] : memref<2x16xi32, #tpu.memory_space<smem>>
    %c1_142 = arith.constant 1 : index
    %c13_143 = arith.constant 13 : index
    %167 = memref.load %arg0[%c1_142, %c13_143] : memref<2x16xi32, #tpu.memory_space<smem>>
    %168 = arith.index_cast %166 : i32 to index
    %c0_144 = arith.constant 0 : index
    %169 = vector.load %arg21[%168, %c0_144] : memref<32x128xf32, #tpu.memory_space<vmem>>, vector<1x128xf32>
    %170 = arith.index_cast %167 : i32 to index
    %c0_145 = arith.constant 0 : index
    %171 = vector.load %arg21[%170, %c0_145] : memref<32x128xf32, #tpu.memory_space<vmem>>, vector<1x128xf32>
    %172 = arith.mulf %169, %171 : vector<1x128xf32>
    %c13_146 = arith.constant 13 : index
    %c0_147 = arith.constant 0 : index
    %173 = vector.load %arg22[%c13_146, %c0_147] : memref<16x128xf32, #tpu.memory_space<vmem>>, vector<1x128xf32>
    tpu.vector_store %arg22[%c13_146, %c0_147], %172 {strides = array<i32>} : memref<16x128xf32, #tpu.memory_space<vmem>>, vector<1x128xf32>,
    %c0_148 = arith.constant 0 : index
    %c14 = arith.constant 14 : index
    %174 = memref.load %arg0[%c0_148, %c14] : memref<2x16xi32, #tpu.memory_space<smem>>
    %c1_149 = arith.constant 1 : index
    %c14_150 = arith.constant 14 : index
    %175 = memref.load %arg0[%c1_149, %c14_150] : memref<2x16xi32, #tpu.memory_space<smem>>
    %176 = arith.index_cast %174 : i32 to index
    %c0_151 = arith.constant 0 : index
    %177 = vector.load %arg21[%176, %c0_151] : memref<32x128xf32, #tpu.memory_space<vmem>>, vector<1x128xf32>
    %178 = arith.index_cast %175 : i32 to index
    %c0_152 = arith.constant 0 : index
    %179 = vector.load %arg21[%178, %c0_152] : memref<32x128xf32, #tpu.memory_space<vmem>>, vector<1x128xf32>
    %180 = arith.mulf %177, %179 : vector<1x128xf32>
    %c14_153 = arith.constant 14 : index
    %c0_154 = arith.constant 0 : index
    %181 = vector.load %arg22[%c14_153, %c0_154] : memref<16x128xf32, #tpu.memory_space<vmem>>, vector<1x128xf32>
    tpu.vector_store %arg22[%c14_153, %c0_154], %180 {strides = array<i32>} : memref<16x128xf32, #tpu.memory_space<vmem>>, vector<1x128xf32>,
    %c0_155 = arith.constant 0 : index
    %c15 = arith.constant 15 : index
    %182 = memref.load %arg0[%c0_155, %c15] : memref<2x16xi32, #tpu.memory_space<smem>>
    %c1_156 = arith.constant 1 : index
    %c15_157 = arith.constant 15 : index
    %183 = memref.load %arg0[%c1_156, %c15_157] : memref<2x16xi32, #tpu.memory_space<smem>>
    %184 = arith.index_cast %182 : i32 to index
    %c0_158 = arith.constant 0 : index
    %185 = vector.load %arg21[%184, %c0_158] : memref<32x128xf32, #tpu.memory_space<vmem>>, vector<1x128xf32>
    %186 = arith.index_cast %183 : i32 to index
    %c0_159 = arith.constant 0 : index
    %187 = vector.load %arg21[%186, %c0_159] : memref<32x128xf32, #tpu.memory_space<vmem>>, vector<1x128xf32>
    %188 = arith.mulf %185, %187 : vector<1x128xf32>
    %c15_160 = arith.constant 15 : index
    %c0_161 = arith.constant 0 : index
    %189 = vector.load %arg22[%c15_160, %c0_161] : memref<16x128xf32, #tpu.memory_space<vmem>>, vector<1x128xf32>
    tpu.vector_store %arg22[%c15_160, %c0_161], %188 {strides = array<i32>} : memref<16x128xf32, #tpu.memory_space<vmem>>, vector<1x128xf32>,
    %c0_162 = arith.constant 0 : index
    %c0_163 = arith.constant 0 : index
    %190 = vector.load %arg22[%c0_162, %c0_163] : memref<16x128xf32, #tpu.memory_space<vmem>>, vector<16x128xf32>
    %c0_164 = arith.constant 0 : index
    %c0_165 = arith.constant 0 : index
    %191 = vector.load %arg18[%c0_164, %c0_165] : memref<128x128xf32, #tpu.memory_space<vmem>>, vector<128x128xf32>
    %cst_166 = arith.constant dense<0.000000e+00> : vector<16x128xf32>
    %192 = tpu.matmul %190, %191, %cst_166 {dimension_numbers = #tpu.dot_dimension_numbers<[1], [0], [0], [1], [0, 0, 1, 1], [], []>} : vector<16x128xf32>, vector<128x128xf32>, vector<16x128xf32> -> vector<16x128xf32>
    %c0_167 = arith.constant 0 : index
    %c0_168 = arith.constant 0 : index
    %193 = vector.load %arg19[%c0_167, %c0_168] : memref<1x128xf32, #tpu.memory_space<vmem>>, vector<1x128xf32>
    %194 = vector.broadcast %193 : vector<1x128xf32> to vector<16x128xf32>
    %195 = arith.addf %192, %194 : vector<16x128xf32>
    %c0_169 = arith.constant 0 : index
    %c0_170 = arith.constant 0 : index
    %196 = vector.load %arg20[%c0_169, %c0_170] : memref<16x128xf32, #tpu.memory_space<vmem>>, vector<16x128xf32>
    tpu.vector_store %arg20[%c0_169, %c0_170], %195 {strides = array<i32>} : memref<16x128xf32, #tpu.memory_space<vmem>>, vector<16x128xf32>,
    return
  }
}

</mosaic_0001>

<llo_original>
// kernel: mul.14
$region0: #{mul.14}
  #allocation2 [shape = 's32[1]{0}', space=sflag, size = 0x4, scoped, tag = 'scoped memory for mul.14']
  %s0 = inlined_call_operand.hbm [shape: f32[1,128], index: 0, kind: input, shape index: {}]
  %s1 = inlined_call_operand.vmem [shape: f32[1,128], index: 1, kind: input, shape index: {}]
  %s2 = inlined_call_operand.vmem [shape: f32[1,128], index: 2, kind: output, shape index: {}]
  $region1: #{mul.14} parent=0
    #allocation0 [shape = 'u8[512]{0}', space=vmem, size = 0x400, scoped, tag = 'operand span for operand 0']
    #allocation1 [shape = 's32[1]{0}', space=sflag, size = 0x4, scoped, tag = 'scoped memory for mul.14']
    %3 = vsyncpa [#allocation1], 0
    %s5 = ssub.s32 16, 16
    %6 = vsyncadd [#allocation1], %s5
    %s8 = sshll.u32 [#allocation0], 4
    %s9 = int_to_ptr.vmem [resolvable:$true] %s8
    %11 = dma.hbm_to_vmem [thread:$0]  %s0, 16, %s9, [#allocation1]
    %12 = dma.done [#allocation1], 16
    %v13 = vld [vmem:[#allocation0] sm:$0x1]
    %v14 = vld [vmem:[%s1] sm:$0x1]
    %15 = xla_tuple %v13, %v14
    %16 = xla_tuple %15
    %v17 = vmul.f32 %v13, %v14
    %18 = xla_tuple %v17
    %19 = vst [vmem:[%s2] sm:$0x1] %v17
    %20 = vsyncpa [#allocation1], 1

// kernel: gin_net2_forward.1
$region0: #{gin_net2_forward.1}
  #allocation0 [shape = 'u32[]', space=smem, size = 0x4, offset = 0x4, fixed_abs, tag = 'smem constant byte address 0x4 - core index']
  #allocation1 [shape = 'u32[144,128]{1,0:T(1,128)}', space=vmem, size = 0x12000, scoped, tag = 'internal scratch']
  #allocation2 [shape = 'f32[32,128]{1,0:T(8,128)}', space=vmem, size = 0x4000, scoped, tag = 'scratch operand']
  #allocation3 [shape = 'f32[16,128]{1,0:T(8,128)}', space=vmem, size = 0x2000, scoped, tag = 'scratch operand']
  %s0 = inlined_call_operand.vmem [shape: s32[2,16], index: 0, kind: input, shape index: {}]
  %s1 = inlined_call_operand.vmem [shape: f32[2], index: 1, kind: input, shape index: {}]
  %s2 = inlined_call_operand.vmem [shape: f32[32,128], index: 2, kind: input, shape index: {}]
  %s3 = inlined_call_operand.vmem [shape: bf16[32,32], index: 3, kind: input, shape index: {}]
  %s4 = inlined_call_operand.vmem [shape: f32[128,128], index: 4, kind: input, shape index: {}]
  %s5 = inlined_call_operand.vmem [shape: f32[1,128], index: 5, kind: input, shape index: {}]
  %s6 = inlined_call_operand.vmem [shape: f32[128,128], index: 6, kind: input, shape index: {}]
  %s7 = inlined_call_operand.vmem [shape: f32[1,128], index: 7, kind: input, shape index: {}]
  %s8 = inlined_call_operand.vmem [shape: f32[128,128], index: 8, kind: input, shape index: {}]
  %s9 = inlined_call_operand.vmem [shape: f32[1,128], index: 9, kind: input, shape index: {}]
  %s10 = inlined_call_operand.vmem [shape: f32[1,128], index: 10, kind: input, shape index: {}]
  %s11 = inlined_call_operand.vmem [shape: f32[128,128], index: 11, kind: input, shape index: {}]
  %s12 = inlined_call_operand.vmem [shape: f32[1,128], index: 12, kind: input, shape index: {}]
  %s13 = inlined_call_operand.vmem [shape: f32[1,128], index: 13, kind: input, shape index: {}]
  %s14 = inlined_call_operand.vmem [shape: f32[128,128], index: 14, kind: input, shape index: {}]
  %s15 = inlined_call_operand.vmem [shape: f32[1,128], index: 15, kind: input, shape index: {}]
  %s16 = inlined_call_operand.vmem [shape: f32[128,128], index: 16, kind: input, shape index: {}]
  %s17 = inlined_call_operand.vmem [shape: f32[1,128], index: 17, kind: input, shape index: {}]
  %s18 = inlined_call_operand.vmem [shape: f32[128,128], index: 18, kind: input, shape index: {}]
  %s19 = inlined_call_operand.vmem [shape: f32[1,128], index: 19, kind: input, shape index: {}]
  %s20 = inlined_call_operand.vmem [shape: f32[16,128], index: 20, kind: output, shape index: {}]
  %s21 = sld [smem:[#allocation0]]
  $region98: #{gin_net2_forward.1} parent=0
    _
  %s23 = ssub.s32 1, %s21
  %s24 = scalar_select 0, %s23, %s21
  $region1: #{gin_net2_forward.1} parent=0
    #allocation4 [shape = 'u8[1024]{0}', space=smem, size = 0x400, scoped, tag = 'input window, operand 0, single buffered']
    #allocation5 [shape = 's32[1]{0}', space=sflag, size = 0x4, scoped, tag = 'scoped memory for gin_net2_forward.1']
    #allocation6 [shape = 'u8[512]{0}', space=smem, size = 0x200, scoped, tag = 'input window, operand 1, single buffered']
    #allocation7 [shape = 's32[1]{0}', space=sflag, size = 0x4, scoped, tag = 'scoped memory for gin_net2_forward.1']
    %25 = vsyncpa [#allocation5], 0
    %26 = vsyncpa [#allocation7], 0
    // Predicated region
    $region2: #{gin_net2_forward.1} parent=1 // pred_check
      _
    $region3: #{gin_net2_forward.1} parent=1 // pred_check_branch
      %28 = sbr.rel (0) target = $region5
    $region4: #{gin_net2_forward.1} parent=1 // pred_region
      %s30 = ssub.s32 32, 32
      %31 = vsyncadd [#allocation5], %s30
      %s33 = sshll.u32 %s0, 4
      %s34 = int_to_ptr.vmem [resolvable:$true] %s33
      %36 = dma.vmem_to_smem %s34, 32, [#allocation4], [#allocation5]
    $region5: #{gin_net2_forward.1} parent=1 // pred_fallthru
      _
    // Predicated region
    $region6: #{gin_net2_forward.1} parent=1 // pred_check
      _
    $region7: #{gin_net2_forward.1} parent=1 // pred_check_branch
      %38 = sbr.rel (0) target = $region9
    $region8: #{gin_net2_forward.1} parent=1 // pred_region
      %s40 = ssub.s32 16, 16
      %41 = vsyncadd [#allocation7], %s40
      %s43 = sshll.u32 %s1, 4
      %s44 = int_to_ptr.vmem [resolvable:$true] %s43
      %46 = dma.vmem_to_smem %s44, 16, [#allocation6], [#allocation7]
    $region9: #{gin_net2_forward.1} parent=1 // pred_fallthru
      _
    // Predicated region
    $region10: #{gin_net2_forward.1} parent=1 // pred_check
      _
    $region11: #{gin_net2_forward.1} parent=1 // pred_check_branch
      %48 = sbr.rel (0) target = $region13
    $region12: #{gin_net2_forward.1} parent=1 // pred_region
      _
    $region13: #{gin_net2_forward.1} parent=1 // pred_fallthru
      _
    // Predicated region
    $region14: #{gin_net2_forward.1} parent=1 // pred_check
      _
    $region15: #{gin_net2_forward.1} parent=1 // pred_check_branch
      %50 = sbr.rel (0) target = $region17
    $region16: #{gin_net2_forward.1} parent=1 // pred_region
      _
    $region17: #{gin_net2_forward.1} parent=1 // pred_fallthru
      _
    // Predicated region
    $region18: #{gin_net2_forward.1} parent=1 // pred_check
      _
    $region19: #{gin_net2_forward.1} parent=1 // pred_check_branch
      %52 = sbr.rel (0) target = $region21
    $region20: #{gin_net2_forward.1} parent=1 // pred_region
      _
    $region21: #{gin_net2_forward.1} parent=1 // pred_fallthru
      _
    // Predicated region
    $region22: #{gin_net2_forward.1} parent=1 // pred_check
      _
    $region23: #{gin_net2_forward.1} parent=1 // pred_check_branch
      %54 = sbr.rel (0) target = $region25
    $region24: #{gin_net2_forward.1} parent=1 // pred_region
      _
    $region25: #{gin_net2_forward.1} parent=1 // pred_fallthru
      _
    // Predicated region
    $region26: #{gin_net2_forward.1} parent=1 // pred_check
      _
    $region27: #{gin_net2_forward.1} parent=1 // pred_check_branch
      %56 = sbr.rel (0) target = $region29
    $region28: #{gin_net2_forward.1} parent=1 // pred_region
      _
    $region29: #{gin_net2_forward.1} parent=1 // pred_fallthru
      _
    // Predicated region
    $region30: #{gin_net2_forward.1} parent=1 // pred_check
      _
    $region31: #{gin_net2_forward.1} parent=1 // pred_check_branch
      %58 = sbr.rel (0) target = $region33
    $region32: #{gin_net2_forward.1} parent=1 // pred_region
      _
    $region33: #{gin_net2_forward.1} parent=1 // pred_fallthru
      _
    // Predicated region
    $region34: #{gin_net2_forward.1} parent=1 // pred_check
      _
    $region35: #{gin_net2_forward.1} parent=1 // pred_check_branch
      %60 = sbr.rel (0) target = $region37
    $region36: #{gin_net2_forward.1} parent=1 // pred_region
      _
    $region37: #{gin_net2_forward.1} parent=1 // pred_fallthru
      _
    // Predicated region
    $region38: #{gin_net2_forward.1} parent=1 // pred_check
      _
    $region39: #{gin_net2_forward.1} parent=1 // pred_check_branch
      %62 = sbr.rel (0) target = $region41
    $region40: #{gin_net2_forward.1} parent=1 // pred_region
      _
    $region41: #{gin_net2_forward.1} parent=1 // pred_fallthru
      _
    // Predicated region
    $region42: #{gin_net2_forward.1} parent=1 // pred_check
      _
    $region43: #{gin_net2_forward.1} parent=1 // pred_check_branch
      %64 = sbr.rel (0) target = $region45
    $region44: #{gin_net2_forward.1} parent=1 // pred_region
      _
    $region45: #{gin_net2_forward.1} parent=1 // pred_fallthru
      _
    // Predicated region
    $region46: #{gin_net2_forward.1} parent=1 // pred_check
      _
    $region47: #{gin_net2_forward.1} parent=1 // pred_check_branch
      %66 = sbr.rel (0) target = $region49
    $region48: #{gin_net2_forward.1} parent=1 // pred_region
      _
    $region49: #{gin_net2_forward.1} parent=1 // pred_fallthru
      _
    // Predicated region
    $region50: #{gin_net2_forward.1} parent=1 // pred_check
      _
    $region51: #{gin_net2_forward.1} parent=1 // pred_check_branch
      %68 = sbr.rel (0) target = $region53
    $region52: #{gin_net2_forward.1} parent=1 // pred_region
      _
    $region53: #{gin_net2_forward.1} parent=1 // pred_fallthru
      _
    // Predicated region
    $region54: #{gin_net2_forward.1} parent=1 // pred_check
      _
    $region55: #{gin_net2_forward.1} parent=1 // pred_check_branch
      %70 = sbr.rel (0) target = $region57
    $region56: #{gin_net2_forward.1} parent=1 // pred_region
      _
    $region57: #{gin_net2_forward.1} parent=1 // pred_fallthru
      _
    // Predicated region
    $region58: #{gin_net2_forward.1} parent=1 // pred_check
      _
    $region59: #{gin_net2_forward.1} parent=1 // pred_check_branch
      %72 = sbr.rel (0) target = $region61
    $region60: #{gin_net2_forward.1} parent=1 // pred_region
      _
    $region61: #{gin_net2_forward.1} parent=1 // pred_fallthru
      _
    // Predicated region
    $region62: #{gin_net2_forward.1} parent=1 // pred_check
      _
    $region63: #{gin_net2_forward.1} parent=1 // pred_check_branch
      %74 = sbr.rel (0) target = $region65
    $region64: #{gin_net2_forward.1} parent=1 // pred_region
      _
    $region65: #{gin_net2_forward.1} parent=1 // pred_fallthru
      _
    // Predicated region
    $region66: #{gin_net2_forward.1} parent=1 // pred_check
      _
    $region67: #{gin_net2_forward.1} parent=1 // pred_check_branch
      %76 = sbr.rel (0) target = $region69
    $region68: #{gin_net2_forward.1} parent=1 // pred_region
      _
    $region69: #{gin_net2_forward.1} parent=1 // pred_fallthru
      _
    // Predicated region
    $region70: #{gin_net2_forward.1} parent=1 // pred_check
      _
    $region71: #{gin_net2_forward.1} parent=1 // pred_check_branch
      %78 = sbr.rel (0) target = $region73
    $region72: #{gin_net2_forward.1} parent=1 // pred_region
      _
    $region73: #{gin_net2_forward.1} parent=1 // pred_fallthru
      _
    // Predicated region
    $region74: #{gin_net2_forward.1} parent=1 // pred_check
      _
    $region75: #{gin_net2_forward.1} parent=1 // pred_check_branch
      %80 = sbr.rel (0) target = $region77
    $region76: #{gin_net2_forward.1} parent=1 // pred_region
      _
    $region77: #{gin_net2_forward.1} parent=1 // pred_fallthru
      _
    // Predicated region
    $region78: #{gin_net2_forward.1} parent=1 // pred_check
      _
    $region79: #{gin_net2_forward.1} parent=1 // pred_check_branch
      %82 = sbr.rel (0) target = $region81
    $region80: #{gin_net2_forward.1} parent=1 // pred_region
      _
    $region81: #{gin_net2_forward.1} parent=1 // pred_fallthru
      _
    // Predicated region
    $region82: #{gin_net2_forward.1} parent=1 // pred_check
      _
    $region83: #{gin_net2_forward.1} parent=1 // pred_check_branch
      %84 = sbr.rel (0) target = $region85
    $region84: #{gin_net2_forward.1} parent=1 // pred_region
      %85 = dma.done [#allocation5], 32
    $region85: #{gin_net2_forward.1} parent=1 // pred_fallthru
      _
    // Predicated region
    $region86: #{gin_net2_forward.1} parent=1 // pred_check
      _
    $region87: #{gin_net2_forward.1} parent=1 // pred_check_branch
      %87 = sbr.rel (0) target = $region89
    $region88: #{gin_net2_forward.1} parent=1 // pred_region
      %88 = dma.done [#allocation7], 16
    $region89: #{gin_net2_forward.1} parent=1 // pred_fallthru
      _
    %89 = sfence
    %v90 = vld [vmem:[%s2] sm:$0xff]
    %v91 = vld [vmem:[%s2 + $0x8] sm:$0xff]
    %v92 = vld [vmem:[%s2 + $0x10] sm:$0xff]
    %v93 = vld [vmem:[%s2 + $0x18] sm:$0xff]
    %v94 = vld [vmem:[%s3] sm:$0xf]
    %v95 = vld [vmem:[%s3 + $0x4] sm:$0xf]
    %v96 = vld [vmem:[%s3 + $0x8] sm:$0xf]
    %v97 = vld [vmem:[%s3 + $0xc] sm:$0xf]
    %v98 = vunpack.c.l.bf16 %v94
    %v99 = vunpack.c.l.bf16 %v95
    %v100 = vunpack.c.l.bf16 %v96
    %v101 = vunpack.c.l.bf16 %v97
    %s102 = sld [smem:[#allocation6]]
    %s103 = sld [smem:[#allocation6 + $0x1]]
    %s104 = sadd.f32 %s102, 1.0
    %v105 = vstv %s104
    %v106 = vmul.f32 %v105, %v90
    %v107 = vmul.f32 %v105, %v91
    %v108 = vmul.f32 %v105, %v92
    %v109 = vmul.f32 %v105, %v93
    %vm110 = vcmask 261120
    %v112 = vsel %vm110, %v98, 0
    %v115 = vsel %vm110, %v99, 0
    %v118 = vsel %vm110, %v100, 0
    %v121 = vsel %vm110, %v101, 0
    %123 = vmatprep.subr.mxu0 0.0
    %124 = vmatpush1.msra.mxu0 %v90
    %125 = vmatprep.subr.mxu0 0.0
    %126 = vmatpush1.msra.mxu0 %v91
    %127 = vmatprep.subr.mxu0 0.0
    %128 = vmatpush1.msra.mxu0 %v92
    %129 = vmatprep.subr.mxu0 0.0
    %130 = vmatpush1.msra.mxu0 %v93
    %131 = vmatprep.subr.mxu0 0.0
    %132 = vmatpush1.msra.mxu0 0.0
    %133 = vmatprep.subr.mxu0 0.0
    %134 = vmatpush1.msra.mxu0 0.0
    %135 = vmatprep.subr.mxu0 0.0
    %136 = vmatpush1.msra.mxu0 0.0
    %137 = vmatprep.subr.mxu0 0.0
    %138 = vmatpush1.msra.mxu0 0.0
    %139 = vmatprep.subr.mxu0 0.0
    %140 = vmatpush1.msra.mxu0 0.0
    %141 = vmatprep.subr.mxu0 0.0
    %142 = vmatpush1.msra.mxu0 0.0
    %143 = vmatprep.subr.mxu0 0.0
    %144 = vmatpush1.msra.mxu0 0.0
    %145 = vmatprep.subr.mxu0 0.0
    %146 = vmatpush1.msra.mxu0 0.0
    %147 = vmatprep.subr.mxu0 0.0
    %148 = vmatpush1.msra.mxu0 0.0
    %149 = vmatprep.subr.mxu0 0.0
    %150 = vmatpush1.msra.mxu0 0.0
    %151 = vmatprep.subr.mxu0 0.0
    %152 = vmatpush1.msra.mxu0 0.0
    %153 = vmatprep.subr.mxu0 0.0
    %154 = vmatpush1.msra.mxu0 0.0
    %155 = vmatprep.subr.mxu0 0.0
    %156 = vmatpush1.msra.mxu0 0.0
    %157 = vmatprep.subr.mxu0 0.0
    %158 = vmatpush1.msra.mxu0 0.0
    %159 = vmatprep.subr.mxu0 0.0
    %160 = vmatpush1.msra.mxu0 0.0
    %161 = vmatprep.subr.mxu0 0.0
    %162 = vmatpush1.msra.mxu0 0.0
    %163 = vmatprep.subr.mxu0 0.0
    %164 = vmatpush1.msra.mxu0 0.0
    %165 = vmatprep.subr.mxu0 0.0
    %166 = vmatpush1.msra.mxu0 0.0
    %167 = vmatprep.subr.mxu0 0.0
    %168 = vmatpush1.msra.mxu0 0.0
    %169 = vmatprep.subr.mxu0 0.0
    %170 = vmatpush1.msra.mxu0 0.0
    %171 = vmatprep.subr.mxu0 0.0
    %172 = vmatpush1.msra.mxu0 0.0
    %173 = vmatprep.subr.mxu0 0.0
    %174 = vmatpush1.msra.mxu0 0.0
    %175 = vmatprep.subr.mxu0 0.0
    %176 = vmatpush1.msra.mxu0 0.0
    %177 = vmatprep.subr.mxu0 0.0
    %178 = vmatpush1.msra.mxu0 0.0
    %179 = vmatprep.subr.mxu0 0.0
    %180 = vmatpush1.msra.mxu0 0.0
    %181 = vmatprep.subr.mxu0 0.0
    %182 = vmatpush1.msra.mxu0 0.0
    %183 = vmatprep.subr.mxu0 0.0
    %184 = vmatpush1.msra.mxu0 0.0
    %185 = vmatprep.subr.mxu0 0.0
    %186 = vmatpush1.msra.mxu0 0.0
    %187 = vmatprep.mubr.f32.mxu0 0.0
    %188 = vmatmul.mubr.f32.gmra.mrb[0].mxu0 %v112
    %v189 = vpop.f32.mrb[0].mxu0
    %v190 = vadd.f32 %v106, %v189
    %v191 = vpop.f32.mrb[0].mxu0
    %192 = vmatprep.mubr.f32.mxu0 0.0
    %193 = vmatmul.mubr.f32.gmra.mrb[0].mxu0 %v115
    %v194 = vpop.f32.mrb[0].mxu0
    %v195 = vadd.f32 %v107, %v194
    %v196 = vpop.f32.mrb[0].mxu0
    %197 = vmatprep.mubr.f32.mxu0 0.0
    %198 = vmatmul.mubr.f32.gmra.mrb[0].mxu0 %v118
    %v199 = vpop.f32.mrb[0].mxu0
    %v200 = vadd.f32 %v108, %v199
    %v201 = vpop.f32.mrb[0].mxu0
    %202 = vmatprep.mubr.f32.mxu0 0.0
    %203 = vmatmul.mubr.f32.gmra.mrb[0].mxu0 %v121
    %v204 = vpop.f32.mrb[0].mxu0
    %v205 = vadd.f32 %v109, %v204
    %v206 = vpop.f32.mrb[0].mxu0
    %207 = vdwg.mxu0
    %v208 = vld [vmem:[%s4] sm:$0xff]
    %v209 = vld [vmem:[%s4 + $0x8] sm:$0xff]
    %v210 = vld [vmem:[%s4 + $0x10] sm:$0xff]
    %v211 = vld [vmem:[%s4 + $0x18] sm:$0xff]
    %v212 = vld [vmem:[%s4 + $0x20] sm:$0xff]
    %v213 = vld [vmem:[%s4 + $0x28] sm:$0xff]
    %v214 = vld [vmem:[%s4 + $0x30] sm:$0xff]
    %v215 = vld [vmem:[%s4 + $0x38] sm:$0xff]
    %v216 = vld [vmem:[%s4 + $0x40] sm:$0xff]
    %v217 = vld [vmem:[%s4 + $0x48] sm:$0xff]
    %v218 = vld [vmem:[%s4 + $0x50] sm:$0xff]
    %v219 = vld [vmem:[%s4 + $0x58] sm:$0xff]
    %v220 = vld [vmem:[%s4 + $0x60] sm:$0xff]
    %v221 = vld [vmem:[%s4 + $0x68] sm:$0xff]
    %v222 = vld [vmem:[%s4 + $0x70] sm:$0xff]
    %v223 = vld [vmem:[%s4 + $0x78] sm:$0xff]
    %v224 = vld [vmem:[%s5] sm:$0x1]
    %v226 = vlaneseq
    %v227 = vshrl.u32 %v226, 7
    %v228 = vsub.s32 0, %v227
    %v229 = vrot.slane %v224, %v228
    %231 = vmatprep.subr.mxu0 0.0
    %232 = vmatpush1.msra.mxu0 %v208
    %233 = vmatprep.subr.mxu0 0.0
    %234 = vmatpush1.msra.mxu0 %v209
    %235 = vmatprep.subr.mxu0 0.0
    %236 = vmatpush1.msra.mxu0 %v210
    %237 = vmatprep.subr.mxu0 0.0
    %238 = vmatpush1.msra.mxu0 %v211
    %239 = vmatprep.subr.mxu0 0.0
    %240 = vmatpush1.msra.mxu0 %v212
    %241 = vmatprep.subr.mxu0 0.0
    %242 = vmatpush1.msra.mxu0 %v213
    %243 = vmatprep.subr.mxu0 0.0
    %244 = vmatpush1.msra.mxu0 %v214
    %245 = vmatprep.subr.mxu0 0.0
    %246 = vmatpush1.msra.mxu0 %v215
    %247 = vmatprep.subr.mxu0 0.0
    %248 = vmatpush1.msra.mxu0 %v216
    %249 = vmatprep.subr.mxu0 0.0
    %250 = vmatpush1.msra.mxu0 %v217
    %251 = vmatprep.subr.mxu0 0.0
    %252 = vmatpush1.msra.mxu0 %v218
    %253 = vmatprep.subr.mxu0 0.0
    %254 = vmatpush1.msra.mxu0 %v219
    %255 = vmatprep.subr.mxu0 0.0
    %256 = vmatpush1.msra.mxu0 %v220
    %257 = vmatprep.subr.mxu0 0.0
    %258 = vmatpush1.msra.mxu0 %v221
    %259 = vmatprep.subr.mxu0 0.0
    %260 = vmatpush1.msra.mxu0 %v222
    %261 = vmatprep.subr.mxu0 0.0
    %262 = vmatpush1.msra.mxu0 %v223
    %263 = vmatprep.subr.mxu0 0.0
    %264 = vmatpush1.msra.mxu0 0.0
    %265 = vmatprep.subr.mxu0 0.0
    %266 = vmatpush1.msra.mxu0 0.0
    %267 = vmatprep.subr.mxu0 0.0
    %268 = vmatpush1.msra.mxu0 0.0
    %269 = vmatprep.subr.mxu0 0.0
    %270 = vmatpush1.msra.mxu0 0.0
    %271 = vmatprep.subr.mxu0 0.0
    %272 = vmatpush1.msra.mxu0 0.0
    %273 = vmatprep.subr.mxu0 0.0
    %274 = vmatpush1.msra.mxu0 0.0
    %275 = vmatprep.subr.mxu0 0.0
    %276 = vmatpush1.msra.mxu0 0.0
    %277 = vmatprep.subr.mxu0 0.0
    %278 = vmatpush1.msra.mxu0 0.0
    %279 = vmatprep.subr.mxu0 0.0
    %280 = vmatpush1.msra.mxu0 0.0
    %281 = vmatprep.subr.mxu0 0.0
    %282 = vmatpush1.msra.mxu0 0.0
    %283 = vmatprep.subr.mxu0 0.0
    %284 = vmatpush1.msra.mxu0 0.0
    %285 = vmatprep.subr.mxu0 0.0
    %286 = vmatpush1.msra.mxu0 0.0
    %287 = vmatprep.subr.mxu0 0.0
    %288 = vmatpush1.msra.mxu0 0.0
    %289 = vmatprep.subr.mxu0 0.0
    %290 = vmatpush1.msra.mxu0 0.0
    %291 = vmatprep.subr.mxu0 0.0
    %292 = vmatpush1.msra.mxu0 0.0
    %293 = vmatprep.subr.mxu0 0.0
    %294 = vmatpush1.msra.mxu0 0.0
    %295 = vmatprep.mubr.f32.mxu0 0.0
    %296 = vmatmul.mubr.f32.gmra.mrb[0].mxu0 %v190
    %v297 = vpop.f32.mrb[0].mxu0
    %v298 = vadd.f32 %v229, %v297
    %v299 = vpop.f32.mrb[0].mxu0
    %300 = vmatprep.mubr.f32.mxu0 0.0
    %301 = vmatmul.mubr.f32.gmra.mrb[0].mxu0 %v195
    %v302 = vpop.f32.mrb[0].mxu0
    %v303 = vadd.f32 %v229, %v302
    %v304 = vpop.f32.mrb[0].mxu0
    %305 = vmatprep.mubr.f32.mxu0 0.0
    %306 = vmatmul.mubr.f32.gmra.mrb[0].mxu0 %v200
    %v307 = vpop.f32.mrb[0].mxu0
    %v308 = vadd.f32 %v229, %v307
    %v309 = vpop.f32.mrb[0].mxu0
    %310 = vmatprep.mubr.f32.mxu0 0.0
    %311 = vmatmul.mubr.f32.gmra.mrb[0].mxu0 %v205
    %v312 = vpop.f32.mrb[0].mxu0
    %v313 = vadd.f32 %v229, %v312
    %v314 = vpop.f32.mrb[0].mxu0
    %315 = vdwg.mxu0
    %v316 = vmax.f32 %v298, 0.0
    %v317 = vmax.f32 %v303, 0.0
    %v318 = vmax.f32 %v308, 0.0
    %v319 = vmax.f32 %v313, 0.0
    %v320 = vld [vmem:[%s6] sm:$0xff]
    %v321 = vld [vmem:[%s6 + $0x8] sm:$0xff]
    %v322 = vld [vmem:[%s6 + $0x10] sm:$0xff]
    %v323 = vld [vmem:[%s6 + $0x18] sm:$0xff]
    %v324 = vld [vmem:[%s6 + $0x20] sm:$0xff]
    %v325 = vld [vmem:[%s6 + $0x28] sm:$0xff]
    %v326 = vld [vmem:[%s6 + $0x30] sm:$0xff]
    %v327 = vld [vmem:[%s6 + $0x38] sm:$0xff]
    %v328 = vld [vmem:[%s6 + $0x40] sm:$0xff]
    %v329 = vld [vmem:[%s6 + $0x48] sm:$0xff]
    %v330 = vld [vmem:[%s6 + $0x50] sm:$0xff]
    %v331 = vld [vmem:[%s6 + $0x58] sm:$0xff]
    %v332 = vld [vmem:[%s6 + $0x60] sm:$0xff]
    %v333 = vld [vmem:[%s6 + $0x68] sm:$0xff]
    %v334 = vld [vmem:[%s6 + $0x70] sm:$0xff]
    %v335 = vld [vmem:[%s6 + $0x78] sm:$0xff]
    %v336 = vld [vmem:[%s7] sm:$0x1]
    %v338 = vlaneseq
    %v339 = vshrl.u32 %v338, 7
    %v340 = vsub.s32 0, %v339
    %v341 = vrot.slane %v336, %v340
    %343 = vmatprep.subr.mxu0 0.0
    %344 = vmatpush1.msra.mxu0 %v320
    %345 = vmatprep.subr.mxu0 0.0
    %346 = vmatpush1.msra.mxu0 %v321
    %347 = vmatprep.subr.mxu0 0.0
    %348 = vmatpush1.msra.mxu0 %v322
    %349 = vmatprep.subr.mxu0 0.0
    %350 = vmatpush1.msra.mxu0 %v323
    %351 = vmatprep.subr.mxu0 0.0
    %352 = vmatpush1.msra.mxu0 %v324
    %353 = vmatprep.subr.mxu0 0.0
    %354 = vmatpush1.msra.mxu0 %v325
    %355 = vmatprep.subr.mxu0 0.0
    %356 = vmatpush1.msra.mxu0 %v326
    %357 = vmatprep.subr.mxu0 0.0
    %358 = vmatpush1.msra.mxu0 %v327
    %359 = vmatprep.subr.mxu0 0.0
    %360 = vmatpush1.msra.mxu0 %v328
    %361 = vmatprep.subr.mxu0 0.0
    %362 = vmatpush1.msra.mxu0 %v329
    %363 = vmatprep.subr.mxu0 0.0
    %364 = vmatpush1.msra.mxu0 %v330
    %365 = vmatprep.subr.mxu0 0.0
    %366 = vmatpush1.msra.mxu0 %v331
    %367 = vmatprep.subr.mxu0 0.0
    %368 = vmatpush1.msra.mxu0 %v332
    %369 = vmatprep.subr.mxu0 0.0
    %370 = vmatpush1.msra.mxu0 %v333
    %371 = vmatprep.subr.mxu0 0.0
    %372 = vmatpush1.msra.mxu0 %v334
    %373 = vmatprep.subr.mxu0 0.0
    %374 = vmatpush1.msra.mxu0 %v335
    %375 = vmatprep.subr.mxu0 0.0
    %376 = vmatpush1.msra.mxu0 0.0
    %377 = vmatprep.subr.mxu0 0.0
    %378 = vmatpush1.msra.mxu0 0.0
    %379 = vmatprep.subr.mxu0 0.0
    %380 = vmatpush1.msra.mxu0 0.0
    %381 = vmatprep.subr.mxu0 0.0
    %382 = vmatpush1.msra.mxu0 0.0
    %383 = vmatprep.subr.mxu0 0.0
    %384 = vmatpush1.msra.mxu0 0.0
    %385 = vmatprep.subr.mxu0 0.0
    %386 = vmatpush1.msra.mxu0 0.0
    %387 = vmatprep.subr.mxu0 0.0
    %388 = vmatpush1.msra.mxu0 0.0
    %389 = vmatprep.subr.mxu0 0.0
    %390 = vmatpush1.msra.mxu0 0.0
    %391 = vmatprep.subr.mxu0 0.0
    %392 = vmatpush1.msra.mxu0 0.0
    %393 = vmatprep.subr.mxu0 0.0
    %394 = vmatpush1.msra.mxu0 0.0
    %395 = vmatprep.subr.mxu0 0.0
    %396 = vmatpush1.msra.mxu0 0.0
    %397 = vmatprep.subr.mxu0 0.0
    %398 = vmatpush1.msra.mxu0 0.0
    %399 = vmatprep.subr.mxu0 0.0
    %400 = vmatpush1.msra.mxu0 0.0
    %401 = vmatprep.subr.mxu0 0.0
    %402 = vmatpush1.msra.mxu0 0.0
    %403 = vmatprep.subr.mxu0 0.0
    %404 = vmatpush1.msra.mxu0 0.0
    %405 = vmatprep.subr.mxu0 0.0
    %406 = vmatpush1.msra.mxu0 0.0
    %407 = vmatprep.mubr.f32.mxu0 0.0
    %408 = vmatmul.mubr.f32.gmra.mrb[0].mxu0 %v316
    %v409 = vpop.f32.mrb[0].mxu0
    %v410 = vadd.f32 %v341, %v409
    %v411 = vpop.f32.mrb[0].mxu0
    %412 = vmatprep.mubr.f32.mxu0 0.0
    %413 = vmatmul.mubr.f32.gmra.mrb[0].mxu0 %v317
    %v414 = vpop.f32.mrb[0].mxu0
    %v415 = vadd.f32 %v341, %v414
    %v416 = vpop.f32.mrb[0].mxu0
    %417 = vmatprep.mubr.f32.mxu0 0.0
    %418 = vmatmul.mubr.f32.gmra.mrb[0].mxu0 %v318
    %v419 = vpop.f32.mrb[0].mxu0
    %v420 = vadd.f32 %v341, %v419
    %v421 = vpop.f32.mrb[0].mxu0
    %422 = vmatprep.mubr.f32.mxu0 0.0
    %423 = vmatmul.mubr.f32.gmra.mrb[0].mxu0 %v319
    %v424 = vpop.f32.mrb[0].mxu0
    %v425 = vadd.f32 %v341, %v424
    %v426 = vpop.f32.mrb[0].mxu0
    %427 = vdwg.mxu0
    %v428 = vmax.f32 %v410, 0.0
    %v429 = vmax.f32 %v415, 0.0
    %v430 = vmax.f32 %v420, 0.0
    %v431 = vmax.f32 %v425, 0.0
    %v432 = vld [vmem:[%s8] sm:$0xff]
    %v433 = vld [vmem:[%s8 + $0x8] sm:$0xff]
    %v434 = vld [vmem:[%s8 + $0x10] sm:$0xff]
    %v435 = vld [vmem:[%s8 + $0x18] sm:$0xff]
    %v436 = vld [vmem:[%s8 + $0x20] sm:$0xff]
    %v437 = vld [vmem:[%s8 + $0x28] sm:$0xff]
    %v438 = vld [vmem:[%s8 + $0x30] sm:$0xff]
    %v439 = vld [vmem:[%s8 + $0x38] sm:$0xff]
    %v440 = vld [vmem:[%s8 + $0x40] sm:$0xff]
    %v441 = vld [vmem:[%s8 + $0x48] sm:$0xff]
    %v442 = vld [vmem:[%s8 + $0x50] sm:$0xff]
    %v443 = vld [vmem:[%s8 + $0x58] sm:$0xff]
    %v444 = vld [vmem:[%s8 + $0x60] sm:$0xff]
    %v445 = vld [vmem:[%s8 + $0x68] sm:$0xff]
    %v446 = vld [vmem:[%s8 + $0x70] sm:$0xff]
    %v447 = vld [vmem:[%s8 + $0x78] sm:$0xff]
    %v448 = vld [vmem:[%s9] sm:$0x1]
    %v450 = vlaneseq
    %v451 = vshrl.u32 %v450, 7
    %v452 = vsub.s32 0, %v451
    %v453 = vrot.slane %v448, %v452
    %455 = vmatprep.subr.mxu0 0.0
    %456 = vmatpush1.msra.mxu0 %v432
    %457 = vmatprep.subr.mxu0 0.0
    %458 = vmatpush1.msra.mxu0 %v433
    %459 = vmatprep.subr.mxu0 0.0
    %460 = vmatpush1.msra.mxu0 %v434
    %461 = vmatprep.subr.mxu0 0.0
    %462 = vmatpush1.msra.mxu0 %v435
    %463 = vmatprep.subr.mxu0 0.0
    %464 = vmatpush1.msra.mxu0 %v436
    %465 = vmatprep.subr.mxu0 0.0
    %466 = vmatpush1.msra.mxu0 %v437
    %467 = vmatprep.subr.mxu0 0.0
    %468 = vmatpush1.msra.mxu0 %v438
    %469 = vmatprep.subr.mxu0 0.0
    %470 = vmatpush1.msra.mxu0 %v439
    %471 = vmatprep.subr.mxu0 0.0
    %472 = vmatpush1.msra.mxu0 %v440
    %473 = vmatprep.subr.mxu0 0.0
    %474 = vmatpush1.msra.mxu0 %v441
    %475 = vmatprep.subr.mxu0 0.0
    %476 = vmatpush1.msra.mxu0 %v442
    %477 = vmatprep.subr.mxu0 0.0
    %478 = vmatpush1.msra.mxu0 %v443
    %479 = vmatprep.subr.mxu0 0.0
    %480 = vmatpush1.msra.mxu0 %v444
    %481 = vmatprep.subr.mxu0 0.0
    %482 = vmatpush1.msra.mxu0 %v445
    %483 = vmatprep.subr.mxu0 0.0
    %484 = vmatpush1.msra.mxu0 %v446
    %485 = vmatprep.subr.mxu0 0.0
    %486 = vmatpush1.msra.mxu0 %v447
    %487 = vmatprep.subr.mxu0 0.0
    %488 = vmatpush1.msra.mxu0 0.0
    %489 = vmatprep.subr.mxu0 0.0
    %490 = vmatpush1.msra.mxu0 0.0
    %491 = vmatprep.subr.mxu0 0.0
    %492 = vmatpush1.msra.mxu0 0.0
    %493 = vmatprep.subr.mxu0 0.0
    %494 = vmatpush1.msra.mxu0 0.0
    %495 = vmatprep.subr.mxu0 0.0
    %496 = vmatpush1.msra.mxu0 0.0
    %497 = vmatprep.subr.mxu0 0.0
    %498 = vmatpush1.msra.mxu0 0.0
    %499 = vmatprep.subr.mxu0 0.0
    %500 = vmatpush1.msra.mxu0 0.0
    %501 = vmatprep.subr.mxu0 0.0
    %502 = vmatpush1.msra.mxu0 0.0
    %503 = vmatprep.subr.mxu0 0.0
    %504 = vmatpush1.msra.mxu0 0.0
    %505 = vmatprep.subr.mxu0 0.0
    %506 = vmatpush1.msra.mxu0 0.0
    %507 = vmatprep.subr.mxu0 0.0
    %508 = vmatpush1.msra.mxu0 0.0
    %509 = vmatprep.subr.mxu0 0.0
    %510 = vmatpush1.msra.mxu0 0.0
    %511 = vmatprep.subr.mxu0 0.0
    %512 = vmatpush1.msra.mxu0 0.0
    %513 = vmatprep.subr.mxu0 0.0
    %514 = vmatpush1.msra.mxu0 0.0
    %515 = vmatprep.subr.mxu0 0.0
    %516 = vmatpush1.msra.mxu0 0.0
    %517 = vmatprep.subr.mxu0 0.0
    %518 = vmatpush1.msra.mxu0 0.0
    %519 = vmatprep.mubr.f32.mxu0 0.0
    %520 = vmatmul.mubr.f32.gmra.mrb[0].mxu0 %v428
    %v521 = vpop.f32.mrb[0].mxu0
    %v522 = vadd.f32 %v453, %v521
    %v523 = vpop.f32.mrb[0].mxu0
    %524 = vmatprep.mubr.f32.mxu0 0.0
    %525 = vmatmul.mubr.f32.gmra.mrb[0].mxu0 %v429
    %v526 = vpop.f32.mrb[0].mxu0
    %v527 = vadd.f32 %v453, %v526
    %v528 = vpop.f32.mrb[0].mxu0
    %529 = vmatprep.mubr.f32.mxu0 0.0
    %530 = vmatmul.mubr.f32.gmra.mrb[0].mxu0 %v430
    %v531 = vpop.f32.mrb[0].mxu0
    %v532 = vadd.f32 %v453, %v531
    %v533 = vpop.f32.mrb[0].mxu0
    %534 = vmatprep.mubr.f32.mxu0 0.0
    %535 = vmatmul.mubr.f32.gmra.mrb[0].mxu0 %v431
    %v536 = vpop.f32.mrb[0].mxu0
    %v537 = vadd.f32 %v453, %v536
    %v538 = vpop.f32.mrb[0].mxu0
    %539 = vdwg.mxu0
    %v540 = vmax.f32 %v522, 0.0
    %v541 = vmax.f32 %v527, 0.0
    %v542 = vmax.f32 %v532, 0.0
    %v543 = vmax.f32 %v537, 0.0
    %v544 = vld [vmem:[%s10] sm:$0x1]
    %v546 = vlaneseq
    %v547 = vshrl.u32 %v546, 7
    %v548 = vsub.s32 0, %v547
    %v549 = vrot.slane %v544, %v548
    %v551 = vadd.f32 %v540, %v549
    %v552 = vadd.f32 %v541, %v549
    %v553 = vadd.f32 %v542, %v549
    %v554 = vadd.f32 %v543, %v549
    %s555 = sadd.f32 %s103, 1.0
    %v556 = vstv %s555
    %v557 = vmul.f32 %v556, %v551
    %v558 = vmul.f32 %v556, %v552
    %v559 = vmul.f32 %v556, %v553
    %v560 = vmul.f32 %v556, %v554
    %561 = vmatprep.subr.mxu0 0.0
    %562 = vmatpush1.msra.mxu0 %v551
    %563 = vmatprep.subr.mxu0 0.0
    %564 = vmatpush1.msra.mxu0 %v552
    %565 = vmatprep.subr.mxu0 0.0
    %566 = vmatpush1.msra.mxu0 %v553
    %567 = vmatprep.subr.mxu0 0.0
    %568 = vmatpush1.msra.mxu0 %v554
    %569 = vmatprep.subr.mxu0 0.0
    %570 = vmatpush1.msra.mxu0 0.0
    %571 = vmatprep.subr.mxu0 0.0
    %572 = vmatpush1.msra.mxu0 0.0
    %573 = vmatprep.subr.mxu0 0.0
    %574 = vmatpush1.msra.mxu0 0.0
    %575 = vmatprep.subr.mxu0 0.0
    %576 = vmatpush1.msra.mxu0 0.0
    %577 = vmatprep.subr.mxu0 0.0
    %578 = vmatpush1.msra.mxu0 0.0
    %579 = vmatprep.subr.mxu0 0.0
    %580 = vmatpush1.msra.mxu0 0.0
    %581 = vmatprep.subr.mxu0 0.0
    %582 = vmatpush1.msra.mxu0 0.0
    %583 = vmatprep.subr.mxu0 0.0
    %584 = vmatpush1.msra.mxu0 0.0
    %585 = vmatprep.subr.mxu0 0.0
    %586 = vmatpush1.msra.mxu0 0.0
    %587 = vmatprep.subr.mxu0 0.0
    %588 = vmatpush1.msra.mxu0 0.0
    %589 = vmatprep.subr.mxu0 0.0
    %590 = vmatpush1.msra.mxu0 0.0
    %591 = vmatprep.subr.mxu0 0.0
    %592 = vmatpush1.msra.mxu0 0.0
    %593 = vmatprep.subr.mxu0 0.0
    %594 = vmatpush1.msra.mxu0 0.0
    %595 = vmatprep.subr.mxu0 0.0
    %596 = vmatpush1.msra.mxu0 0.0
    %597 = vmatprep.subr.mxu0 0.0
    %598 = vmatpush1.msra.mxu0 0.0
    %599 = vmatprep.subr.mxu0 0.0
    %600 = vmatpush1.msra.mxu0 0.0
    %601 = vmatprep.subr.mxu0 0.0
    %602 = vmatpush1.msra.mxu0 0.0
    %603 = vmatprep.subr.mxu0 0.0
    %604 = vmatpush1.msra.mxu0 0.0
    %605 = vmatprep.subr.mxu0 0.0
    %606 = vmatpush1.msra.mxu0 0.0
    %607 = vmatprep.subr.mxu0 0.0
    %608 = vmatpush1.msra.mxu0 0.0
    %609 = vmatprep.subr.mxu0 0.0
    %610 = vmatpush1.msra.mxu0 0.0
    %611 = vmatprep.subr.mxu0 0.0
    %612 = vmatpush1.msra.mxu0 0.0
    %613 = vmatprep.subr.mxu0 0.0
    %614 = vmatpush1.msra.mxu0 0.0
    %615 = vmatprep.subr.mxu0 0.0
    %616 = vmatpush1.msra.mxu0 0.0
    %617 = vmatprep.subr.mxu0 0.0
    %618 = vmatpush1.msra.mxu0 0.0
    %619 = vmatprep.subr.mxu0 0.0
    %620 = vmatpush1.msra.mxu0 0.0
    %621 = vmatprep.subr.mxu0 0.0
    %622 = vmatpush1.msra.mxu0 0.0
    %623 = vmatprep.subr.mxu0 0.0
    %624 = vmatpush1.msra.mxu0 0.0
    %625 = vmatprep.mubr.f32.mxu0 0.0
    %626 = vmatmul.mubr.f32.gmra.mrb[0].mxu0 %v112
    %v627 = vpop.f32.mrb[0].mxu0
    %v628 = vadd.f32 %v557, %v627
    %v629 = vpop.f32.mrb[0].mxu0
    %630 = vmatprep.mubr.f32.mxu0 0.0
    %631 = vmatmul.mubr.f32.gmra.mrb[0].mxu0 %v115
    %v632 = vpop.f32.mrb[0].mxu0
    %v633 = vadd.f32 %v558, %v632
    %v634 = vpop.f32.mrb[0].mxu0
    %635 = vmatprep.mubr.f32.mxu0 0.0
    %636 = vmatmul.mubr.f32.gmra.mrb[0].mxu0 %v118
    %v637 = vpop.f32.mrb[0].mxu0
    %v638 = vadd.f32 %v559, %v637
    %v639 = vpop.f32.mrb[0].mxu0
    %640 = vmatprep.mubr.f32.mxu0 0.0
    %641 = vmatmul.mubr.f32.gmra.mrb[0].mxu0 %v121
    %v642 = vpop.f32.mrb[0].mxu0
    %v643 = vadd.f32 %v560, %v642
    %v644 = vpop.f32.mrb[0].mxu0
    %645 = vdwg.mxu0
    %v646 = vld [vmem:[%s11] sm:$0xff]
    %v647 = vld [vmem:[%s11 + $0x8] sm:$0xff]
    %v648 = vld [vmem:[%s11 + $0x10] sm:$0xff]
    %v649 = vld [vmem:[%s11 + $0x18] sm:$0xff]
    %v650 = vld [vmem:[%s11 + $0x20] sm:$0xff]
    %v651 = vld [vmem:[%s11 + $0x28] sm:$0xff]
    %v652 = vld [vmem:[%s11 + $0x30] sm:$0xff]
    %v653 = vld [vmem:[%s11 + $0x38] sm:$0xff]
    %v654 = vld [vmem:[%s11 + $0x40] sm:$0xff]
    %v655 = vld [vmem:[%s11 + $0x48] sm:$0xff]
    %v656 = vld [vmem:[%s11 + $0x50] sm:$0xff]
    %v657 = vld [vmem:[%s11 + $0x58] sm:$0xff]
    %v658 = vld [vmem:[%s11 + $0x60] sm:$0xff]
    %v659 = vld [vmem:[%s11 + $0x68] sm:$0xff]
    %v660 = vld [vmem:[%s11 + $0x70] sm:$0xff]
    %v661 = vld [vmem:[%s11 + $0x78] sm:$0xff]
    %v662 = vld [vmem:[%s12] sm:$0x1]
    %v664 = vlaneseq
    %v665 = vshrl.u32 %v664, 7
    %v666 = vsub.s32 0, %v665
    %v667 = vrot.slane %v662, %v666
    %669 = vmatprep.subr.mxu0 0.0
    %670 = vmatpush1.msra.mxu0 %v646
    %671 = vmatprep.subr.mxu0 0.0
    %672 = vmatpush1.msra.mxu0 %v647
    %673 = vmatprep.subr.mxu0 0.0
    %674 = vmatpush1.msra.mxu0 %v648
    %675 = vmatprep.subr.mxu0 0.0
    %676 = vmatpush1.msra.mxu0 %v649
    %677 = vmatprep.subr.mxu0 0.0
    %678 = vmatpush1.msra.mxu0 %v650
    %679 = vmatprep.subr.mxu0 0.0
    %680 = vmatpush1.msra.mxu0 %v651
    %681 = vmatprep.subr.mxu0 0.0
    %682 = vmatpush1.msra.mxu0 %v652
    %683 = vmatprep.subr.mxu0 0.0
    %684 = vmatpush1.msra.mxu0 %v653
    %685 = vmatprep.subr.mxu0 0.0
    %686 = vmatpush1.msra.mxu0 %v654
    %687 = vmatprep.subr.mxu0 0.0
    %688 = vmatpush1.msra.mxu0 %v655
    %689 = vmatprep.subr.mxu0 0.0
    %690 = vmatpush1.msra.mxu0 %v656
    %691 = vmatprep.subr.mxu0 0.0
    %692 = vmatpush1.msra.mxu0 %v657
    %693 = vmatprep.subr.mxu0 0.0
    %694 = vmatpush1.msra.mxu0 %v658
    %695 = vmatprep.subr.mxu0 0.0
    %696 = vmatpush1.msra.mxu0 %v659
    %697 = vmatprep.subr.mxu0 0.0
    %698 = vmatpush1.msra.mxu0 %v660
    %699 = vmatprep.subr.mxu0 0.0
    %700 = vmatpush1.msra.mxu0 %v661
    %701 = vmatprep.subr.mxu0 0.0
    %702 = vmatpush1.msra.mxu0 0.0
    %703 = vmatprep.subr.mxu0 0.0
    %704 = vmatpush1.msra.mxu0 0.0
    %705 = vmatprep.subr.mxu0 0.0
    %706 = vmatpush1.msra.mxu0 0.0
    %707 = vmatprep.subr.mxu0 0.0
    %708 = vmatpush1.msra.mxu0 0.0
    %709 = vmatprep.subr.mxu0 0.0
    %710 = vmatpush1.msra.mxu0 0.0
    %711 = vmatprep.subr.mxu0 0.0
    %712 = vmatpush1.msra.mxu0 0.0
    %713 = vmatprep.subr.mxu0 0.0
    %714 = vmatpush1.msra.mxu0 0.0
    %715 = vmatprep.subr.mxu0 0.0
    %716 = vmatpush1.msra.mxu0 0.0
    %717 = vmatprep.subr.mxu0 0.0
    %718 = vmatpush1.msra.mxu0 0.0
    %719 = vmatprep.subr.mxu0 0.0
    %720 = vmatpush1.msra.mxu0 0.0
    %721 = vmatprep.subr.mxu0 0.0
    %722 = vmatpush1.msra.mxu0 0.0
    %723 = vmatprep.subr.mxu0 0.0
    %724 = vmatpush1.msra.mxu0 0.0
    %725 = vmatprep.subr.mxu0 0.0
    %726 = vmatpush1.msra.mxu0 0.0
    %727 = vmatprep.subr.mxu0 0.0
    %728 = vmatpush1.msra.mxu0 0.0
    %729 = vmatprep.subr.mxu0 0.0
    %730 = vmatpush1.msra.mxu0 0.0
    %731 = vmatprep.subr.mxu0 0.0
    %732 = vmatpush1.msra.mxu0 0.0
    %733 = vmatprep.mubr.f32.mxu0 0.0
    %734 = vmatmul.mubr.f32.gmra.mrb[0].mxu0 %v628
    %v735 = vpop.f32.mrb[0].mxu0
    %v736 = vadd.f32 %v667, %v735
    %v737 = vpop.f32.mrb[0].mxu0
    %738 = vmatprep.mubr.f32.mxu0 0.0
    %739 = vmatmul.mubr.f32.gmra.mrb[0].mxu0 %v633
    %v740 = vpop.f32.mrb[0].mxu0
    %v741 = vadd.f32 %v667, %v740
    %v742 = vpop.f32.mrb[0].mxu0
    %743 = vmatprep.mubr.f32.mxu0 0.0
    %744 = vmatmul.mubr.f32.gmra.mrb[0].mxu0 %v638
    %v745 = vpop.f32.mrb[0].mxu0
    %v746 = vadd.f32 %v667, %v745
    %v747 = vpop.f32.mrb[0].mxu0
    %748 = vmatprep.mubr.f32.mxu0 0.0
    %749 = vmatmul.mubr.f32.gmra.mrb[0].mxu0 %v643
    %v750 = vpop.f32.mrb[0].mxu0
    %v751 = vadd.f32 %v667, %v750
    %v752 = vpop.f32.mrb[0].mxu0
    %753 = vdwg.mxu0
    %v754 = vmax.f32 %v736, 0.0
    %v755 = vmax.f32 %v741, 0.0
    %v756 = vmax.f32 %v746, 0.0
    %v757 = vmax.f32 %v751, 0.0
    %v758 = vld [vmem:[%s13] sm:$0x1]
    %v760 = vlaneseq
    %v761 = vshrl.u32 %v760, 7
    %v762 = vsub.s32 0, %v761
    %v763 = vrot.slane %v758, %v762
    %v765 = vadd.f32 %v754, %v763
    %v766 = vadd.f32 %v755, %v763
    %v767 = vadd.f32 %v756, %v763
    %v768 = vadd.f32 %v757, %v763
    %v769 = vld [vmem:[%s14] sm:$0xff]
    %v770 = vld [vmem:[%s14 + $0x8] sm:$0xff]
    %v771 = vld [vmem:[%s14 + $0x10] sm:$0xff]
    %v772 = vld [vmem:[%s14 + $0x18] sm:$0xff]
    %v773 = vld [vmem:[%s14 + $0x20] sm:$0xff]
    %v774 = vld [vmem:[%s14 + $0x28] sm:$0xff]
    %v775 = vld [vmem:[%s14 + $0x30] sm:$0xff]
    %v776 = vld [vmem:[%s14 + $0x38] sm:$0xff]
    %v777 = vld [vmem:[%s14 + $0x40] sm:$0xff]
    %v778 = vld [vmem:[%s14 + $0x48] sm:$0xff]
    %v779 = vld [vmem:[%s14 + $0x50] sm:$0xff]
    %v780 = vld [vmem:[%s14 + $0x58] sm:$0xff]
    %v781 = vld [vmem:[%s14 + $0x60] sm:$0xff]
    %v782 = vld [vmem:[%s14 + $0x68] sm:$0xff]
    %v783 = vld [vmem:[%s14 + $0x70] sm:$0xff]
    %v784 = vld [vmem:[%s14 + $0x78] sm:$0xff]
    %v785 = vld [vmem:[%s15] sm:$0x1]
    %v787 = vlaneseq
    %v788 = vshrl.u32 %v787, 7
    %v789 = vsub.s32 0, %v788
    %v790 = vrot.slane %v785, %v789
    %792 = vmatprep.subr.mxu0 0.0
    %793 = vmatpush1.msra.mxu0 %v769
    %794 = vmatprep.subr.mxu0 0.0
    %795 = vmatpush1.msra.mxu0 %v770
    %796 = vmatprep.subr.mxu0 0.0
    %797 = vmatpush1.msra.mxu0 %v771
    %798 = vmatprep.subr.mxu0 0.0
    %799 = vmatpush1.msra.mxu0 %v772
    %800 = vmatprep.subr.mxu0 0.0
    %801 = vmatpush1.msra.mxu0 %v773
    %802 = vmatprep.subr.mxu0 0.0
    %803 = vmatpush1.msra.mxu0 %v774
    %804 = vmatprep.subr.mxu0 0.0
    %805 = vmatpush1.msra.mxu0 %v775
    %806 = vmatprep.subr.mxu0 0.0
    %807 = vmatpush1.msra.mxu0 %v776
    %808 = vmatprep.subr.mxu0 0.0
    %809 = vmatpush1.msra.mxu0 %v777
    %810 = vmatprep.subr.mxu0 0.0
    %811 = vmatpush1.msra.mxu0 %v778
    %812 = vmatprep.subr.mxu0 0.0
    %813 = vmatpush1.msra.mxu0 %v779
    %814 = vmatprep.subr.mxu0 0.0
    %815 = vmatpush1.msra.mxu0 %v780
    %816 = vmatprep.subr.mxu0 0.0
    %817 = vmatpush1.msra.mxu0 %v781
    %818 = vmatprep.subr.mxu0 0.0
    %819 = vmatpush1.msra.mxu0 %v782
    %820 = vmatprep.subr.mxu0 0.0
    %821 = vmatpush1.msra.mxu0 %v783
    %822 = vmatprep.subr.mxu0 0.0
    %823 = vmatpush1.msra.mxu0 %v784
    %824 = vmatprep.subr.mxu0 0.0
    %825 = vmatpush1.msra.mxu0 0.0
    %826 = vmatprep.subr.mxu0 0.0
    %827 = vmatpush1.msra.mxu0 0.0
    %828 = vmatprep.subr.mxu0 0.0
    %829 = vmatpush1.msra.mxu0 0.0
    %830 = vmatprep.subr.mxu0 0.0
    %831 = vmatpush1.msra.mxu0 0.0
    %832 = vmatprep.subr.mxu0 0.0
    %833 = vmatpush1.msra.mxu0 0.0
    %834 = vmatprep.subr.mxu0 0.0
    %835 = vmatpush1.msra.mxu0 0.0
    %836 = vmatprep.subr.mxu0 0.0
    %837 = vmatpush1.msra.mxu0 0.0
    %838 = vmatprep.subr.mxu0 0.0
    %839 = vmatpush1.msra.mxu0 0.0
    %840 = vmatprep.subr.mxu0 0.0
    %841 = vmatpush1.msra.mxu0 0.0
    %842 = vmatprep.subr.mxu0 0.0
    %843 = vmatpush1.msra.mxu0 0.0
    %844 = vmatprep.subr.mxu0 0.0
    %845 = vmatpush1.msra.mxu0 0.0
    %846 = vmatprep.subr.mxu0 0.0
    %847 = vmatpush1.msra.mxu0 0.0
    %848 = vmatprep.subr.mxu0 0.0
    %849 = vmatpush1.msra.mxu0 0.0
    %850 = vmatprep.subr.mxu0 0.0
    %851 = vmatpush1.msra.mxu0 0.0
    %852 = vmatprep.subr.mxu0 0.0
    %853 = vmatpush1.msra.mxu0 0.0
    %854 = vmatprep.subr.mxu0 0.0
    %855 = vmatpush1.msra.mxu0 0.0
    %856 = vmatprep.mubr.f32.mxu0 0.0
    %857 = vmatmul.mubr.f32.gmra.mrb[0].mxu0 %v765
    %v858 = vpop.f32.mrb[0].mxu0
    %v859 = vadd.f32 %v790, %v858
    %v860 = vpop.f32.mrb[0].mxu0
    %861 = vmatprep.mubr.f32.mxu0 0.0
    %862 = vmatmul.mubr.f32.gmra.mrb[0].mxu0 %v766
    %v863 = vpop.f32.mrb[0].mxu0
    %v864 = vadd.f32 %v790, %v863
    %v865 = vpop.f32.mrb[0].mxu0
    %866 = vmatprep.mubr.f32.mxu0 0.0
    %867 = vmatmul.mubr.f32.gmra.mrb[0].mxu0 %v767
    %v868 = vpop.f32.mrb[0].mxu0
    %v869 = vadd.f32 %v790, %v868
    %v870 = vpop.f32.mrb[0].mxu0
    %871 = vmatprep.mubr.f32.mxu0 0.0
    %872 = vmatmul.mubr.f32.gmra.mrb[0].mxu0 %v768
    %v873 = vpop.f32.mrb[0].mxu0
    %v874 = vadd.f32 %v790, %v873
    %v875 = vpop.f32.mrb[0].mxu0
    %876 = vdwg.mxu0
    %v877 = vmax.f32 %v859, 0.0
    %v878 = vmax.f32 %v864, 0.0
    %v879 = vmax.f32 %v869, 0.0
    %v880 = vmax.f32 %v874, 0.0
    %v881 = vld [vmem:[%s16] sm:$0xff]
    %v882 = vld [vmem:[%s16 + $0x8] sm:$0xff]
    %v883 = vld [vmem:[%s16 + $0x10] sm:$0xff]
    %v884 = vld [vmem:[%s16 + $0x18] sm:$0xff]
    %v885 = vld [vmem:[%s16 + $0x20] sm:$0xff]
    %v886 = vld [vmem:[%s16 + $0x28] sm:$0xff]
    %v887 = vld [vmem:[%s16 + $0x30] sm:$0xff]
    %v888 = vld [vmem:[%s16 + $0x38] sm:$0xff]
    %v889 = vld [vmem:[%s16 + $0x40] sm:$0xff]
    %v890 = vld [vmem:[%s16 + $0x48] sm:$0xff]
    %v891 = vld [vmem:[%s16 + $0x50] sm:$0xff]
    %v892 = vld [vmem:[%s16 + $0x58] sm:$0xff]
    %v893 = vld [vmem:[%s16 + $0x60] sm:$0xff]
    %v894 = vld [vmem:[%s16 + $0x68] sm:$0xff]
    %v895 = vld [vmem:[%s16 + $0x70] sm:$0xff]
    %v896 = vld [vmem:[%s16 + $0x78] sm:$0xff]
    %v897 = vld [vmem:[%s17] sm:$0x1]
    %v899 = vlaneseq
    %v900 = vshrl.u32 %v899, 7
    %v901 = vsub.s32 0, %v900
    %v902 = vrot.slane %v897, %v901
    %904 = vmatprep.subr.mxu0 0.0
    %905 = vmatpush1.msra.mxu0 %v881
    %906 = vmatprep.subr.mxu0 0.0
    %907 = vmatpush1.msra.mxu0 %v882
    %908 = vmatprep.subr.mxu0 0.0
    %909 = vmatpush1.msra.mxu0 %v883
    %910 = vmatprep.subr.mxu0 0.0
    %911 = vmatpush1.msra.mxu0 %v884
    %912 = vmatprep.subr.mxu0 0.0
    %913 = vmatpush1.msra.mxu0 %v885
    %914 = vmatprep.subr.mxu0 0.0
    %915 = vmatpush1.msra.mxu0 %v886
    %916 = vmatprep.subr.mxu0 0.0
    %917 = vmatpush1.msra.mxu0 %v887
    %918 = vmatprep.subr.mxu0 0.0
    %919 = vmatpush1.msra.mxu0 %v888
    %920 = vmatprep.subr.mxu0 0.0
    %921 = vmatpush1.msra.mxu0 %v889
    %922 = vmatprep.subr.mxu0 0.0
    %923 = vmatpush1.msra.mxu0 %v890
    %924 = vmatprep.subr.mxu0 0.0
    %925 = vmatpush1.msra.mxu0 %v891
    %926 = vmatprep.subr.mxu0 0.0
    %927 = vmatpush1.msra.mxu0 %v892
    %928 = vmatprep.subr.mxu0 0.0
    %929 = vmatpush1.msra.mxu0 %v893
    %930 = vmatprep.subr.mxu0 0.0
    %931 = vmatpush1.msra.mxu0 %v894
    %932 = vmatprep.subr.mxu0 0.0
    %933 = vmatpush1.msra.mxu0 %v895
    %934 = vmatprep.subr.mxu0 0.0
    %935 = vmatpush1.msra.mxu0 %v896
    %936 = vmatprep.subr.mxu0 0.0
    %937 = vmatpush1.msra.mxu0 0.0
    %938 = vmatprep.subr.mxu0 0.0
    %939 = vmatpush1.msra.mxu0 0.0
    %940 = vmatprep.subr.mxu0 0.0
    %941 = vmatpush1.msra.mxu0 0.0
    %942 = vmatprep.subr.mxu0 0.0
    %943 = vmatpush1.msra.mxu0 0.0
    %944 = vmatprep.subr.mxu0 0.0
    %945 = vmatpush1.msra.mxu0 0.0
    %946 = vmatprep.subr.mxu0 0.0
    %947 = vmatpush1.msra.mxu0 0.0
    %948 = vmatprep.subr.mxu0 0.0
    %949 = vmatpush1.msra.mxu0 0.0
    %950 = vmatprep.subr.mxu0 0.0
    %951 = vmatpush1.msra.mxu0 0.0
    %952 = vmatprep.subr.mxu0 0.0
    %953 = vmatpush1.msra.mxu0 0.0
    %954 = vmatprep.subr.mxu0 0.0
    %955 = vmatpush1.msra.mxu0 0.0
    %956 = vmatprep.subr.mxu0 0.0
    %957 = vmatpush1.msra.mxu0 0.0
    %958 = vmatprep.subr.mxu0 0.0
    %959 = vmatpush1.msra.mxu0 0.0
    %960 = vmatprep.subr.mxu0 0.0
    %961 = vmatpush1.msra.mxu0 0.0
    %962 = vmatprep.subr.mxu0 0.0
    %963 = vmatpush1.msra.mxu0 0.0
    %964 = vmatprep.subr.mxu0 0.0
    %965 = vmatpush1.msra.mxu0 0.0
    %966 = vmatprep.subr.mxu0 0.0
    %967 = vmatpush1.msra.mxu0 0.0
    %968 = vmatprep.mubr.f32.mxu0 0.0
    %969 = vmatmul.mubr.f32.gmra.mrb[0].mxu0 %v877
    %v970 = vpop.f32.mrb[0].mxu0
    %v971 = vadd.f32 %v902, %v970
    %v972 = vpop.f32.mrb[0].mxu0
    %973 = vmatprep.mubr.f32.mxu0 0.0
    %974 = vmatmul.mubr.f32.gmra.mrb[0].mxu0 %v878
    %v975 = vpop.f32.mrb[0].mxu0
    %v976 = vadd.f32 %v902, %v975
    %v977 = vpop.f32.mrb[0].mxu0
    %978 = vmatprep.mubr.f32.mxu0 0.0
    %979 = vmatmul.mubr.f32.gmra.mrb[0].mxu0 %v879
    %v980 = vpop.f32.mrb[0].mxu0
    %v981 = vadd.f32 %v902, %v980
    %v982 = vpop.f32.mrb[0].mxu0
    %983 = vmatprep.mubr.f32.mxu0 0.0
    %984 = vmatmul.mubr.f32.gmra.mrb[0].mxu0 %v880
    %v985 = vpop.f32.mrb[0].mxu0
    %v986 = vadd.f32 %v902, %v985
    %v987 = vpop.f32.mrb[0].mxu0
    %988 = vdwg.mxu0
    %989 = vst [vmem:[#allocation2] sm:$0xff] %v971
    %990 = vst [vmem:[#allocation2 + $0x8] sm:$0xff] %v976
    %991 = vst [vmem:[#allocation2 + $0x10] sm:$0xff] %v981
    %992 = vst [vmem:[#allocation2 + $0x18] sm:$0xff] %v986
    %s993 = sld [smem:[#allocation4]]
    %s994 = sld [smem:[#allocation4 + $0x80]]
    %s995 = scalar_lea.vmem [#allocation2], %s993
    %v996 = vld [vmem:[%s995] sm:$0x1]
    %s997 = scalar_lea.vmem [#allocation2], %s994
    %v998 = vld [vmem:[%s997] sm:$0x1]
    %v999 = vmul.f32 %v996, %v998
    %1000 = vst [vmem:[#allocation3] sm:$0x1] %v999
    %s1001 = sld [smem:[#allocation4 + $0x1]]
    %s1002 = sld [smem:[#allocation4 + $0x81]]
    %s1003 = scalar_lea.vmem [#allocation2], %s1001
    %v1004 = vld [vmem:[%s1003] sm:$0x1]
    %s1005 = scalar_lea.vmem [#allocation2], %s1002
    %v1006 = vld [vmem:[%s1005] sm:$0x1]
    %v1007 = vmul.f32 %v1004, %v1006
    %1008 = vst [vmem:[#allocation3 + $0x1] sm:$0x1] %v1007
    %s1009 = sld [smem:[#allocation4 + $0x2]]
    %s1010 = sld [smem:[#allocation4 + $0x82]]
    %s1011 = scalar_lea.vmem [#allocation2], %s1009
    %v1012 = vld [vmem:[%s1011] sm:$0x1]
    %s1013 = scalar_lea.vmem [#allocation2], %s1010
    %v1014 = vld [vmem:[%s1013] sm:$0x1]
    %v1015 = vmul.f32 %v1012, %v1014
    %1016 = vst [vmem:[#allocation3 + $0x2] sm:$0x1] %v1015
    %s1017 = sld [smem:[#allocation4 + $0x3]]
    %s1018 = sld [smem:[#allocation4 + $0x83]]
    %s1019 = scalar_lea.vmem [#allocation2], %s1017
    %v1020 = vld [vmem:[%s1019] sm:$0x1]
    %s1021 = scalar_lea.vmem [#allocation2], %s1018
    %v1022 = vld [vmem:[%s1021] sm:$0x1]
    %v1023 = vmul.f32 %v1020, %v1022
    %1024 = vst [vmem:[#allocation3 + $0x3] sm:$0x1] %v1023
    %s1025 = sld [smem:[#allocation4 + $0x4]]
    %s1026 = sld [smem:[#allocation4 + $0x84]]
    %s1027 = scalar_lea.vmem [#allocation2], %s1025
    %v1028 = vld [vmem:[%s1027] sm:$0x1]
    %s1029 = scalar_lea.vmem [#allocation2], %s1026
    %v1030 = vld [vmem:[%s1029] sm:$0x1]
    %v1031 = vmul.f32 %v1028, %v1030
    %1032 = vst [vmem:[#allocation3 + $0x4] sm:$0x1] %v1031
    %s1033 = sld [smem:[#allocation4 + $0x5]]
    %s1034 = sld [smem:[#allocation4 + $0x85]]
    %s1035 = scalar_lea.vmem [#allocation2], %s1033
    %v1036 = vld [vmem:[%s1035] sm:$0x1]
    %s1037 = scalar_lea.vmem [#allocation2], %s1034
    %v1038 = vld [vmem:[%s1037] sm:$0x1]
    %v1039 = vmul.f32 %v1036, %v1038
    %1040 = vst [vmem:[#allocation3 + $0x5] sm:$0x1] %v1039
    %s1041 = sld [smem:[#allocation4 + $0x6]]
    %s1042 = sld [smem:[#allocation4 + $0x86]]
    %s1043 = scalar_lea.vmem [#allocation2], %s1041
    %v1044 = vld [vmem:[%s1043] sm:$0x1]
    %s1045 = scalar_lea.vmem [#allocation2], %s1042
    %v1046 = vld [vmem:[%s1045] sm:$0x1]
    %v1047 = vmul.f32 %v1044, %v1046
    %1048 = vst [vmem:[#allocation3 + $0x6] sm:$0x1] %v1047
    %s1049 = sld [smem:[#allocation4 + $0x7]]
    %s1050 = sld [smem:[#allocation4 + $0x87]]
    %s1051 = scalar_lea.vmem [#allocation2], %s1049
    %v1052 = vld [vmem:[%s1051] sm:$0x1]
    %s1053 = scalar_lea.vmem [#allocation2], %s1050
    %v1054 = vld [vmem:[%s1053] sm:$0x1]
    %v1055 = vmul.f32 %v1052, %v1054
    %1056 = vst [vmem:[#allocation3 + $0x7] sm:$0x1] %v1055
    %s1057 = sld [smem:[#allocation4 + $0x8]]
    %s1058 = sld [smem:[#allocation4 + $0x88]]
    %s1059 = scalar_lea.vmem [#allocation2], %s1057
    %v1060 = vld [vmem:[%s1059] sm:$0x1]
    %s1061 = scalar_lea.vmem [#allocation2], %s1058
    %v1062 = vld [vmem:[%s1061] sm:$0x1]
    %v1063 = vmul.f32 %v1060, %v1062
    %1064 = vst [vmem:[#allocation3 + $0x8] sm:$0x1] %v1063
    %s1065 = sld [smem:[#allocation4 + $0x9]]
    %s1066 = sld [smem:[#allocation4 + $0x89]]
    %s1067 = scalar_lea.vmem [#allocation2], %s1065
    %v1068 = vld [vmem:[%s1067] sm:$0x1]
    %s1069 = scalar_lea.vmem [#allocation2], %s1066
    %v1070 = vld [vmem:[%s1069] sm:$0x1]
    %v1071 = vmul.f32 %v1068, %v1070
    %1072 = vst [vmem:[#allocation3 + $0x9] sm:$0x1] %v1071
    %s1073 = sld [smem:[#allocation4 + $0xa]]
    %s1074 = sld [smem:[#allocation4 + $0x8a]]
    %s1075 = scalar_lea.vmem [#allocation2], %s1073
    %v1076 = vld [vmem:[%s1075] sm:$0x1]
    %s1077 = scalar_lea.vmem [#allocation2], %s1074
    %v1078 = vld [vmem:[%s1077] sm:$0x1]
    %v1079 = vmul.f32 %v1076, %v1078
    %1080 = vst [vmem:[#allocation3 + $0xa] sm:$0x1] %v1079
    %s1081 = sld [smem:[#allocation4 + $0xb]]
    %s1082 = sld [smem:[#allocation4 + $0x8b]]
    %s1083 = scalar_lea.vmem [#allocation2], %s1081
    %v1084 = vld [vmem:[%s1083] sm:$0x1]
    %s1085 = scalar_lea.vmem [#allocation2], %s1082
    %v1086 = vld [vmem:[%s1085] sm:$0x1]
    %v1087 = vmul.f32 %v1084, %v1086
    %1088 = vst [vmem:[#allocation3 + $0xb] sm:$0x1] %v1087
    %s1089 = sld [smem:[#allocation4 + $0xc]]
    %s1090 = sld [smem:[#allocation4 + $0x8c]]
    %s1091 = scalar_lea.vmem [#allocation2], %s1089
    %v1092 = vld [vmem:[%s1091] sm:$0x1]
    %s1093 = scalar_lea.vmem [#allocation2], %s1090
    %v1094 = vld [vmem:[%s1093] sm:$0x1]
    %v1095 = vmul.f32 %v1092, %v1094
    %1096 = vst [vmem:[#allocation3 + $0xc] sm:$0x1] %v1095
    %s1097 = sld [smem:[#allocation4 + $0xd]]
    %s1098 = sld [smem:[#allocation4 + $0x8d]]
    %s1099 = scalar_lea.vmem [#allocation2], %s1097
    %v1100 = vld [vmem:[%s1099] sm:$0x1]
    %s1101 = scalar_lea.vmem [#allocation2], %s1098
    %v1102 = vld [vmem:[%s1101] sm:$0x1]
    %v1103 = vmul.f32 %v1100, %v1102
    %1104 = vst [vmem:[#allocation3 + $0xd] sm:$0x1] %v1103
    %s1105 = sld [smem:[#allocation4 + $0xe]]
    %s1106 = sld [smem:[#allocation4 + $0x8e]]
    %s1107 = scalar_lea.vmem [#allocation2], %s1105
    %v1108 = vld [vmem:[%s1107] sm:$0x1]
    %s1109 = scalar_lea.vmem [#allocation2], %s1106
    %v1110 = vld [vmem:[%s1109] sm:$0x1]
    %v1111 = vmul.f32 %v1108, %v1110
    %1112 = vst [vmem:[#allocation3 + $0xe] sm:$0x1] %v1111
    %s1113 = sld [smem:[#allocation4 + $0xf]]
    %s1114 = sld [smem:[#allocation4 + $0x8f]]
    %s1115 = scalar_lea.vmem [#allocation2], %s1113
    %v1116 = vld [vmem:[%s1115] sm:$0x1]
    %s1117 = scalar_lea.vmem [#allocation2], %s1114
    %v1118 = vld [vmem:[%s1117] sm:$0x1]
    %v1119 = vmul.f32 %v1116, %v1118
    %1120 = vst [vmem:[#allocation3 + $0xf] sm:$0x1] %v1119
    %v1121 = vld [vmem:[#allocation3] sm:$0xff]
    %v1122 = vld [vmem:[#allocation3 + $0x8] sm:$0xff]
    %v1123 = vld [vmem:[%s18] sm:$0xff]
    %v1124 = vld [vmem:[%s18 + $0x8] sm:$0xff]
    %v1125 = vld [vmem:[%s18 + $0x10] sm:$0xff]
    %v1126 = vld [vmem:[%s18 + $0x18] sm:$0xff]
    %v1127 = vld [vmem:[%s18 + $0x20] sm:$0xff]
    %v1128 = vld [vmem:[%s18 + $0x28] sm:$0xff]
    %v1129 = vld [vmem:[%s18 + $0x30] sm:$0xff]
    %v1130 = vld [vmem:[%s18 + $0x38] sm:$0xff]
    %v1131 = vld [vmem:[%s18 + $0x40] sm:$0xff]
    %v1132 = vld [vmem:[%s18 + $0x48] sm:$0xff]
    %v1133 = vld [vmem:[%s18 + $0x50] sm:$0xff]
    %v1134 = vld [vmem:[%s18 + $0x58] sm:$0xff]
    %v1135 = vld [vmem:[%s18 + $0x60] sm:$0xff]
    %v1136 = vld [vmem:[%s18 + $0x68] sm:$0xff]
    %v1137 = vld [vmem:[%s18 + $0x70] sm:$0xff]
    %v1138 = vld [vmem:[%s18 + $0x78] sm:$0xff]
    %v1139 = vld [vmem:[%s19] sm:$0x1]
    %v1141 = vlaneseq
    %v1142 = vshrl.u32 %v1141, 7
    %v1143 = vsub.s32 0, %v1142
    %v1144 = vrot.slane %v1139, %v1143
    %1146 = vmatprep.subr.mxu0 0.0
    %1147 = vmatpush1.msra.mxu0 %v1123
    %1148 = vmatprep.subr.mxu0 0.0
    %1149 = vmatpush1.msra.mxu0 %v1124
    %1150 = vmatprep.subr.mxu0 0.0
    %1151 = vmatpush1.msra.mxu0 %v1125
    %1152 = vmatprep.subr.mxu0 0.0
    %1153 = vmatpush1.msra.mxu0 %v1126
    %1154 = vmatprep.subr.mxu0 0.0
    %1155 = vmatpush1.msra.mxu0 %v1127
    %1156 = vmatprep.subr.mxu0 0.0
    %1157 = vmatpush1.msra.mxu0 %v1128
    %1158 = vmatprep.subr.mxu0 0.0
    %1159 = vmatpush1.msra.mxu0 %v1129
    %1160 = vmatprep.subr.mxu0 0.0
    %1161 = vmatpush1.msra.mxu0 %v1130
    %1162 = vmatprep.subr.mxu0 0.0
    %1163 = vmatpush1.msra.mxu0 %v1131
    %1164 = vmatprep.subr.mxu0 0.0
    %1165 = vmatpush1.msra.mxu0 %v1132
    %1166 = vmatprep.subr.mxu0 0.0
    %1167 = vmatpush1.msra.mxu0 %v1133
    %1168 = vmatprep.subr.mxu0 0.0
    %1169 = vmatpush1.msra.mxu0 %v1134
    %1170 = vmatprep.subr.mxu0 0.0
    %1171 = vmatpush1.msra.mxu0 %v1135
    %1172 = vmatprep.subr.mxu0 0.0
    %1173 = vmatpush1.msra.mxu0 %v1136
    %1174 = vmatprep.subr.mxu0 0.0
    %1175 = vmatpush1.msra.mxu0 %v1137
    %1176 = vmatprep.subr.mxu0 0.0
    %1177 = vmatpush1.msra.mxu0 %v1138
    %1178 = vmatprep.subr.mxu0 0.0
    %1179 = vmatpush1.msra.mxu0 0.0
    %1180 = vmatprep.subr.mxu0 0.0
    %1181 = vmatpush1.msra.mxu0 0.0
    %1182 = vmatprep.subr.mxu0 0.0
    %1183 = vmatpush1.msra.mxu0 0.0
    %1184 = vmatprep.subr.mxu0 0.0
    %1185 = vmatpush1.msra.mxu0 0.0
    %1186 = vmatprep.subr.mxu0 0.0
    %1187 = vmatpush1.msra.mxu0 0.0
    %1188 = vmatprep.subr.mxu0 0.0
    %1189 = vmatpush1.msra.mxu0 0.0
    %1190 = vmatprep.subr.mxu0 0.0
    %1191 = vmatpush1.msra.mxu0 0.0
    %1192 = vmatprep.subr.mxu0 0.0
    %1193 = vmatpush1.msra.mxu0 0.0
    %1194 = vmatprep.subr.mxu0 0.0
    %1195 = vmatpush1.msra.mxu0 0.0
    %1196 = vmatprep.subr.mxu0 0.0
    %1197 = vmatpush1.msra.mxu0 0.0
    %1198 = vmatprep.subr.mxu0 0.0
    %1199 = vmatpush1.msra.mxu0 0.0
    %1200 = vmatprep.subr.mxu0 0.0
    %1201 = vmatpush1.msra.mxu0 0.0
    %1202 = vmatprep.subr.mxu0 0.0
    %1203 = vmatpush1.msra.mxu0 0.0
    %1204 = vmatprep.subr.mxu0 0.0
    %1205 = vmatpush1.msra.mxu0 0.0
    %1206 = vmatprep.subr.mxu0 0.0
    %1207 = vmatpush1.msra.mxu0 0.0
    %1208 = vmatprep.subr.mxu0 0.0
    %1209 = vmatpush1.msra.mxu0 0.0
    %1210 = vmatprep.mubr.f32.mxu0 0.0
    %1211 = vmatmul.mubr.f32.gmra.mrb[0].mxu0 %v1121
    %v1212 = vpop.f32.mrb[0].mxu0
    %v1213 = vadd.f32 %v1144, %v1212
    %v1214 = vpop.f32.mrb[0].mxu0
    %1215 = vmatprep.mubr.f32.mxu0 0.0
    %1216 = vmatmul.mubr.f32.gmra.mrb[0].mxu0 %v1122
    %v1217 = vpop.f32.mrb[0].mxu0
    %v1218 = vadd.f32 %v1144, %v1217
    %v1219 = vpop.f32.mrb[0].mxu0
    %1220 = vdwg.mxu0
    %1221 = vst [vmem:[%s20] sm:$0xff] %v1213
    %1222 = vst [vmem:[%s20 + $0x8] sm:$0xff] %v1218
    // Predicated region
    $region90: #{gin_net2_forward.1} parent=1 // pred_check
      _
    $region91: #{gin_net2_forward.1} parent=1 // pred_check_branch
      %1224 = sbr.rel (0) target = $region93
    $region92: #{gin_net2_forward.1} parent=1 // pred_region
      _
    $region93: #{gin_net2_forward.1} parent=1 // pred_fallthru
      _
    // Predicated region
    $region94: #{gin_net2_forward.1} parent=1 // pred_check
      _
    $region95: #{gin_net2_forward.1} parent=1 // pred_check_branch
      %1226 = sbr.rel (0) target = $region97
    $region96: #{gin_net2_forward.1} parent=1 // pred_region
      _
    $region97: #{gin_net2_forward.1} parent=1 // pred_fallthru
      _
    %1227 = vsyncpa [#allocation5], 1
    %1228 = vsyncpa [#allocation7], 1

</llo_original>
